<compile_context>
chip_gen: v6e
topology: v6e:2x2x1
jax: 0.10.0
libtpu: 0.0.40
codegen_flags: <defaults>
</compile_context>

<pallas_src>
import jax
import jax.numpy as jnp
from jax.experimental import pallas as pl
from jax.experimental.pallas import tpu as pltpu

# ----------------------------- config ---------------------------------------

HIDDEN = 32
NUM_LAYERS = 2
NODE_TYPES = {"n0": dict(num=16, feat=8), "n1": dict(num=24, feat=16)}
NODE_ORDER = tuple(NODE_TYPES)
MESSAGE_TYPES = [("n0", "e0", "n1"), ("n1", "e1", "n0"), ("n1", "e2", "n1")]
NUM_EDGES = 40


# ----------------------------- fused Pallas kernel ---------------------------

def _make_fused_kernel(treedef, num_leaves, return_embedding):
    """Builds the single fused kernel for the whole HeteroGNN forward."""

    def kernel(*refs):
        leaf_refs = refs[:num_leaves]
        out_refs = refs[num_leaves:]
        # Materialize all (tiny) operands from VMEM once; everything below is
        # pure value-level jnp and stays resident on-chip.
        tree = jax.tree_util.tree_unflatten(
            treedef, [r[...] for r in leaf_refs])
        x = dict(tree["x"])
        adjs = tree["adj"]

        for lp in tree["layers"]:
            acc = {nt: None for nt in NODE_ORDER}
            # message passing, one (A @ x_src) @ Wse per message type; the
            # division by K (mean over message types) is pre-folded into Wse.
            for mt in MESSAGE_TYPES:
                src, _, dst = mt
                agg = jnp.dot(adjs[mt], x[src],
                              preferred_element_type=jnp.float32)
                c = jnp.dot(agg, lp["wse"][mt],
                            preferred_element_type=jnp.float32)
                acc[dst] = c if acc[dst] is None else acc[dst] + c
            new_x = {}
            for nt in NODE_ORDER:
                # dst path + folded bias (already scaled by 1/K and summed
                # over message types feeding this node type).
                y = (acc[nt]
                     + jnp.dot(x[nt], lp["wde"][nt],
                               preferred_element_type=jnp.float32)
                     + lp["b"][nt])
                # BatchNorm1d(hidden, eps=1.0), training mode (biased var).
                mu = jnp.mean(y, axis=0, keepdims=True)
                var = jnp.mean(jnp.square(y - mu), axis=0, keepdims=True)
                y = (lp["gamma"][nt] * ((y - mu) * jax.lax.rsqrt(var + 1.0))
                     + lp["beta"][nt])
                # LeakyReLU(0.01)
                new_x[nt] = jnp.where(y >= 0.0, y, 0.01 * y)
            x = new_x

        for i, nt in enumerate(NODE_ORDER):
            if return_embedding:
                out_refs[i][...] = x[nt]
            else:
                fc = tree["fc"][nt]
                out_refs[i][...] = (
                    jnp.dot(x[nt], fc["w"],
                            preferred_element_type=jnp.float32) + fc["b"])

    return kernel


def hetero_gnn_forward(node_feature, adjs, folded, return_embedding=False):
    """Runs the whole forward in a single pallas_call (empty grid)."""
    inputs = {"x": dict(node_feature), "adj": dict(adjs),
              "layers": folded["layers"]}
    if not return_embedding:
        inputs["fc"] = folded["fc"]
    leaves, treedef = jax.tree_util.tree_flatten(inputs)

    out_dim = HIDDEN if return_embedding else 1
    out_shape = tuple(
        jax.ShapeDtypeStruct((NODE_TYPES[nt]["num"], out_dim), jnp.float32)
        for nt in NODE_ORDER)

    kernel = _make_fused_kernel(treedef, len(leaves), return_embedding)
    vmem_spec = pl.BlockSpec(memory_space=pltpu.MemorySpace.VMEM)
    outs = pl.pallas_call(
        kernel,
        out_shape=out_shape,
        in_specs=[vmem_spec] * len(leaves),
        out_specs=tuple(vmem_spec for _ in NODE_ORDER),
    )(*leaves)
    return dict(zip(NODE_ORDER, outs))


# ----------------------------- parameter init --------------------------------

def _linear_params(key, fan_in, fan_out):
    kw, kb = jax.random.split(key)
    bound = 1.0 / (fan_in ** 0.5)
    w = jax.random.uniform(kw, (fan_in, fan_out), jnp.float32, -bound, bound)
    b = jax.random.uniform(kb, (1, fan_out), jnp.float32, -bound, bound)
    return w, b


def init_params(key):
    params = {"convs": [], "bns": [], "fc": {}}
    for layer in range(NUM_LAYERS):
        layer_convs = {}
        for mt in MESSAGE_TYPES:
            src, _, dst = mt
            if layer == 0:
                in_src = NODE_TYPES[src]["feat"]
                in_dst = NODE_TYPES[dst]["feat"]
            else:
                in_src = in_dst = HIDDEN
            key, k1, k2, k3 = jax.random.split(key, 4)
            w_src, b_src = _linear_params(k1, in_src, HIDDEN)
            w_dst, b_dst = _linear_params(k2, in_dst, HIDDEN)
            w_upd, b_upd = _linear_params(k3, 2 * HIDDEN, HIDDEN)
            layer_convs[mt] = dict(
                w_src=w_src, b_src=b_src,
                w_dst=w_dst, b_dst=b_dst,
                w_upd_dst=w_upd[:HIDDEN, :],   # multiplies dst_out (concat order)
                w_upd_src=w_upd[HIDDEN:, :],   # multiplies src_out
                b_upd=b_upd,
            )
        params["convs"].append(layer_convs)
        layer_bns = {}
        for nt in NODE_TYPES:
            layer_bns[nt] = dict(gamma=jnp.ones((1, HIDDEN), jnp.float32),
                                 beta=jnp.zeros((1, HIDDEN), jnp.float32))
        params["bns"].append(layer_bns)
    for nt in NODE_TYPES:
        key, kf = jax.random.split(key)
        w, b = _linear_params(kf, HIDDEN, 1)
        params["fc"][nt] = dict(w=w, b=b)
    return params


def fold_params(params):
    """Analytically folds lin_src/lin_dst into lin_update and the 1/K mean
    over message types into the weights; done once, outside the kernel."""
    layers = []
    for layer in range(NUM_LAYERS):
        convs = params["convs"][layer]
        bns = params["bns"][layer]
        k_count = {nt: sum(1 for mt in MESSAGE_TYPES if mt[2] == nt)
                   for nt in NODE_ORDER}
        assert all(k_count[nt] > 0 for nt in NODE_ORDER)
        wse = {}
        wde = {nt: None for nt in NODE_ORDER}
        bsum = {nt: None for nt in NODE_ORDER}
        for mt in MESSAGE_TYPES:
            _, _, dst = mt
            p = convs[mt]
            inv_k = jnp.float32(1.0 / k_count[dst])
            # src path: (agg @ Wsrc + bsrc) @ Wupd_src
            wse[mt] = (p["w_src"] @ p["w_upd_src"]) * inv_k
            # dst path: (x_dst @ Wdst + bdst) @ Wupd_dst
            wde_mt = (p["w_dst"] @ p["w_upd_dst"]) * inv_k
            b_mt = (p["b_upd"]
                    + p["b_src"] @ p["w_upd_src"]
                    + p["b_dst"] @ p["w_upd_dst"]) * inv_k
            wde[dst] = wde_mt if wde[dst] is None else wde[dst] + wde_mt
            bsum[dst] = b_mt if bsum[dst] is None else bsum[dst] + b_mt
        layers.append(dict(
            wse=wse, wde=wde, b=bsum,
            gamma={nt: bns[nt]["gamma"] for nt in NODE_ORDER},
            beta={nt: bns[nt]["beta"] for nt in NODE_ORDER},
        ))
    return {"layers": layers, "fc": params["fc"]}


# ----------------------------- graph glue ------------------------------------

def build_norm_adj(src_idx, dst_idx, n_dst, n_src):
    a = jnp.zeros((n_dst, n_src), jnp.float32).at[dst_idx, src_idx].add(1.0)
    deg = jnp.sum(a, axis=1, keepdims=True)
    return a / jnp.maximum(deg, 1.0)   # mean-aggregation; isolated dst -> 0


# ----------------------------- main ------------------------------------------

if __name__ == "__main__":
    key = jax.random.PRNGKey(0)

    # deterministic node features
    node_feature = {}
    for nt, info in NODE_TYPES.items():
        key, k = jax.random.split(key)
        node_feature[nt] = jax.random.normal(k, (info["num"], info["feat"]),
                                             jnp.float32)

    # deterministic edges -> dense row-normalized adjacencies
    adjs = {}
    for mt in MESSAGE_TYPES:
        src, _, dst = mt
        n_src, n_dst = NODE_TYPES[src]["num"], NODE_TYPES[dst]["num"]
        key, ks, kd = jax.random.split(key, 3)
        src_idx = jax.random.randint(ks, (NUM_EDGES,), 0, n_src)
        dst_idx = jax.random.randint(kd, (NUM_EDGES,), 0, n_dst)
        adjs[mt] = build_norm_adj(src_idx, dst_idx, n_dst, n_src)

    key, kp = jax.random.split(key)
    params = init_params(kp)
    folded = fold_params(params)   # one-time constant folding outside kernel

    out = hetero_gnn_forward(node_feature, adjs, folded)
    out = jax.tree_util.tree_map(jax.block_until_ready, out)

    for nt in NODE_TYPES:
        assert out[nt].shape == (NODE_TYPES[nt]["num"], 1), out[nt].shape
        assert bool(jnp.all(jnp.isfinite(out[nt])))
    print("KERNEL_OK")
</pallas_src>

<mosaic_0001>
module attributes {stable_mosaic.version = 11 : i64} {
  func.func @kernel(%arg0: memref<24x16xf32, #tpu.memory_space<vmem>>, %arg1: memref<16x24xf32, #tpu.memory_space<vmem>>, %arg2: memref<24x24xf32, #tpu.memory_space<vmem>>, %arg3: memref<1x1xf32, #tpu.memory_space<vmem>>, %arg4: memref<32x1xf32, #tpu.memory_space<vmem>>, %arg5: memref<1x1xf32, #tpu.memory_space<vmem>>, %arg6: memref<32x1xf32, #tpu.memory_space<vmem>>, %arg7: memref<1x32xf32, #tpu.memory_space<vmem>>, %arg8: memref<1x32xf32, #tpu.memory_space<vmem>>, %arg9: memref<1x32xf32, #tpu.memory_space<vmem>>, %arg10: memref<1x32xf32, #tpu.memory_space<vmem>>, %arg11: memref<1x32xf32, #tpu.memory_space<vmem>>, %arg12: memref<1x32xf32, #tpu.memory_space<vmem>>, %arg13: memref<8x32xf32, #tpu.memory_space<vmem>>, %arg14: memref<16x32xf32, #tpu.memory_space<vmem>>, %arg15: memref<8x32xf32, #tpu.memory_space<vmem>>, %arg16: memref<16x32xf32, #tpu.memory_space<vmem>>, %arg17: memref<16x32xf32, #tpu.memory_space<vmem>>, %arg18: memref<1x32xf32, #tpu.memory_space<vmem>>, %arg19: memref<1x32xf32, #tpu.memory_space<vmem>>, %arg20: memref<1x32xf32, #tpu.memory_space<vmem>>, %arg21: memref<1x32xf32, #tpu.memory_space<vmem>>, %arg22: memref<1x32xf32, #tpu.memory_space<vmem>>, %arg23: memref<1x32xf32, #tpu.memory_space<vmem>>, %arg24: memref<32x32xf32, #tpu.memory_space<vmem>>, %arg25: memref<32x32xf32, #tpu.memory_space<vmem>>, %arg26: memref<32x32xf32, #tpu.memory_space<vmem>>, %arg27: memref<32x32xf32, #tpu.memory_space<vmem>>, %arg28: memref<32x32xf32, #tpu.memory_space<vmem>>, %arg29: memref<16x8xf32, #tpu.memory_space<vmem>>, %arg30: memref<24x16xf32, #tpu.memory_space<vmem>>, %arg31: memref<16x1xf32, #tpu.memory_space<vmem>>, %arg32: memref<24x1xf32, #tpu.memory_space<vmem>>) attributes {dimension_semantics = [], scalar_prefetch = 0 : i64, scratch_operands = 0 : i64, tpu.core_type = #tpu.core_type<tc>} {
    %c0 = arith.constant 0 : index
    %c0_0 = arith.constant 0 : index
    %0 = vector.load %arg0[%c0, %c0_0] : memref<24x16xf32, #tpu.memory_space<vmem>>, vector<24x16xf32>
    %c0_1 = arith.constant 0 : index
    %c0_2 = arith.constant 0 : index
    %1 = vector.load %arg1[%c0_1, %c0_2] : memref<16x24xf32, #tpu.memory_space<vmem>>, vector<16x24xf32>
    %c0_3 = arith.constant 0 : index
    %c0_4 = arith.constant 0 : index
    %2 = vector.load %arg2[%c0_3, %c0_4] : memref<24x24xf32, #tpu.memory_space<vmem>>, vector<24x24xf32>
    %c0_5 = arith.constant 0 : index
    %c0_6 = arith.constant 0 : index
    %3 = vector.load %arg3[%c0_5, %c0_6] : memref<1x1xf32, #tpu.memory_space<vmem>>, vector<1x1xf32>
    %c0_7 = arith.constant 0 : index
    %c0_8 = arith.constant 0 : index
    %4 = vector.load %arg4[%c0_7, %c0_8] : memref<32x1xf32, #tpu.memory_space<vmem>>, vector<32x1xf32>
    %c0_9 = arith.constant 0 : index
    %c0_10 = arith.constant 0 : index
    %5 = vector.load %arg5[%c0_9, %c0_10] : memref<1x1xf32, #tpu.memory_space<vmem>>, vector<1x1xf32>
    %c0_11 = arith.constant 0 : index
    %c0_12 = arith.constant 0 : index
    %6 = vector.load %arg6[%c0_11, %c0_12] : memref<32x1xf32, #tpu.memory_space<vmem>>, vector<32x1xf32>
    %c0_13 = arith.constant 0 : index
    %c0_14 = arith.constant 0 : index
    %7 = vector.load %arg7[%c0_13, %c0_14] : memref<1x32xf32, #tpu.memory_space<vmem>>, vector<1x32xf32>
    %c0_15 = arith.constant 0 : index
    %c0_16 = arith.constant 0 : index
    %8 = vector.load %arg8[%c0_15, %c0_16] : memref<1x32xf32, #tpu.memory_space<vmem>>, vector<1x32xf32>
    %c0_17 = arith.constant 0 : index
    %c0_18 = arith.constant 0 : index
    %9 = vector.load %arg9[%c0_17, %c0_18] : memref<1x32xf32, #tpu.memory_space<vmem>>, vector<1x32xf32>
    %c0_19 = arith.constant 0 : index
    %c0_20 = arith.constant 0 : index
    %10 = vector.load %arg10[%c0_19, %c0_20] : memref<1x32xf32, #tpu.memory_space<vmem>>, vector<1x32xf32>
    %c0_21 = arith.constant 0 : index
    %c0_22 = arith.constant 0 : index
    %11 = vector.load %arg11[%c0_21, %c0_22] : memref<1x32xf32, #tpu.memory_space<vmem>>, vector<1x32xf32>
    %c0_23 = arith.constant 0 : index
    %c0_24 = arith.constant 0 : index
    %12 = vector.load %arg12[%c0_23, %c0_24] : memref<1x32xf32, #tpu.memory_space<vmem>>, vector<1x32xf32>
    %c0_25 = arith.constant 0 : index
    %c0_26 = arith.constant 0 : index
    %13 = vector.load %arg13[%c0_25, %c0_26] : memref<8x32xf32, #tpu.memory_space<vmem>>, vector<8x32xf32>
    %c0_27 = arith.constant 0 : index
    %c0_28 = arith.constant 0 : index
    %14 = vector.load %arg14[%c0_27, %c0_28] : memref<16x32xf32, #tpu.memory_space<vmem>>, vector<16x32xf32>
    %c0_29 = arith.constant 0 : index
    %c0_30 = arith.constant 0 : index
    %15 = vector.load %arg15[%c0_29, %c0_30] : memref<8x32xf32, #tpu.memory_space<vmem>>, vector<8x32xf32>
    %c0_31 = arith.constant 0 : index
    %c0_32 = arith.constant 0 : index
    %16 = vector.load %arg16[%c0_31, %c0_32] : memref<16x32xf32, #tpu.memory_space<vmem>>, vector<16x32xf32>
    %c0_33 = arith.constant 0 : index
    %c0_34 = arith.constant 0 : index
    %17 = vector.load %arg17[%c0_33, %c0_34] : memref<16x32xf32, #tpu.memory_space<vmem>>, vector<16x32xf32>
    %c0_35 = arith.constant 0 : index
    %c0_36 = arith.constant 0 : index
    %18 = vector.load %arg18[%c0_35, %c0_36] : memref<1x32xf32, #tpu.memory_space<vmem>>, vector<1x32xf32>
    %c0_37 = arith.constant 0 : index
    %c0_38 = arith.constant 0 : index
    %19 = vector.load %arg19[%c0_37, %c0_38] : memref<1x32xf32, #tpu.memory_space<vmem>>, vector<1x32xf32>
    %c0_39 = arith.constant 0 : index
    %c0_40 = arith.constant 0 : index
    %20 = vector.load %arg20[%c0_39, %c0_40] : memref<1x32xf32, #tpu.memory_space<vmem>>, vector<1x32xf32>
    %c0_41 = arith.constant 0 : index
    %c0_42 = arith.constant 0 : index
    %21 = vector.load %arg21[%c0_41, %c0_42] : memref<1x32xf32, #tpu.memory_space<vmem>>, vector<1x32xf32>
    %c0_43 = arith.constant 0 : index
    %c0_44 = arith.constant 0 : index
    %22 = vector.load %arg22[%c0_43, %c0_44] : memref<1x32xf32, #tpu.memory_space<vmem>>, vector<1x32xf32>
    %c0_45 = arith.constant 0 : index
    %c0_46 = arith.constant 0 : index
    %23 = vector.load %arg23[%c0_45, %c0_46] : memref<1x32xf32, #tpu.memory_space<vmem>>, vector<1x32xf32>
    %c0_47 = arith.constant 0 : index
    %c0_48 = arith.constant 0 : index
    %24 = vector.load %arg24[%c0_47, %c0_48] : memref<32x32xf32, #tpu.memory_space<vmem>>, vector<32x32xf32>
    %c0_49 = arith.constant 0 : index
    %c0_50 = arith.constant 0 : index
    %25 = vector.load %arg25[%c0_49, %c0_50] : memref<32x32xf32, #tpu.memory_space<vmem>>, vector<32x32xf32>
    %c0_51 = arith.constant 0 : index
    %c0_52 = arith.constant 0 : index
    %26 = vector.load %arg26[%c0_51, %c0_52] : memref<32x32xf32, #tpu.memory_space<vmem>>, vector<32x32xf32>
    %c0_53 = arith.constant 0 : index
    %c0_54 = arith.constant 0 : index
    %27 = vector.load %arg27[%c0_53, %c0_54] : memref<32x32xf32, #tpu.memory_space<vmem>>, vector<32x32xf32>
    %c0_55 = arith.constant 0 : index
    %c0_56 = arith.constant 0 : index
    %28 = vector.load %arg28[%c0_55, %c0_56] : memref<32x32xf32, #tpu.memory_space<vmem>>, vector<32x32xf32>
    %c0_57 = arith.constant 0 : index
    %c0_58 = arith.constant 0 : index
    %29 = vector.load %arg29[%c0_57, %c0_58] : memref<16x8xf32, #tpu.memory_space<vmem>>, vector<16x8xf32>
    %c0_59 = arith.constant 0 : index
    %c0_60 = arith.constant 0 : index
    %30 = vector.load %arg30[%c0_59, %c0_60] : memref<24x16xf32, #tpu.memory_space<vmem>>, vector<24x16xf32>
    %cst = arith.constant dense<0.000000e+00> : vector<24x8xf32>
    %31 = tpu.matmul %0, %29, %cst {dimension_numbers = #tpu.dot_dimension_numbers<[1], [0], [0], [1], [0, 0, 1, 1], [], []>} : vector<24x16xf32>, vector<16x8xf32>, vector<24x8xf32> -> vector<24x8xf32>
    %cst_61 = arith.constant dense<0.000000e+00> : vector<24x32xf32>
    %32 = tpu.matmul %31, %15, %cst_61 {dimension_numbers = #tpu.dot_dimension_numbers<[1], [0], [0], [1], [0, 0, 1, 1], [], []>} : vector<24x8xf32>, vector<8x32xf32>, vector<24x32xf32> -> vector<24x32xf32>
    %cst_62 = arith.constant dense<0.000000e+00> : vector<16x16xf32>
    %33 = tpu.matmul %1, %30, %cst_62 {dimension_numbers = #tpu.dot_dimension_numbers<[1], [0], [0], [1], [0, 0, 1, 1], [], []>} : vector<16x24xf32>, vector<24x16xf32>, vector<16x16xf32> -> vector<16x16xf32>
    %cst_63 = arith.constant dense<0.000000e+00> : vector<16x32xf32>
    %34 = tpu.matmul %33, %16, %cst_63 {dimension_numbers = #tpu.dot_dimension_numbers<[1], [0], [0], [1], [0, 0, 1, 1], [], []>} : vector<16x16xf32>, vector<16x32xf32>, vector<16x32xf32> -> vector<16x32xf32>
    %cst_64 = arith.constant dense<0.000000e+00> : vector<24x16xf32>
    %35 = tpu.matmul %2, %30, %cst_64 {dimension_numbers = #tpu.dot_dimension_numbers<[1], [0], [0], [1], [0, 0, 1, 1], [], []>} : vector<24x24xf32>, vector<24x16xf32>, vector<24x16xf32> -> vector<24x16xf32>
    %cst_65 = arith.constant dense<0.000000e+00> : vector<24x32xf32>
    %36 = tpu.matmul %35, %17, %cst_65 {dimension_numbers = #tpu.dot_dimension_numbers<[1], [0], [0], [1], [0, 0, 1, 1], [], []>} : vector<24x16xf32>, vector<16x32xf32>, vector<24x32xf32> -> vector<24x32xf32>
    %37 = arith.addf %32, %36 : vector<24x32xf32>
    %cst_66 = arith.constant dense<0.000000e+00> : vector<16x32xf32>
    %38 = tpu.matmul %29, %13, %cst_66 {dimension_numbers = #tpu.dot_dimension_numbers<[1], [0], [0], [1], [0, 0, 1, 1], [], []>} : vector<16x8xf32>, vector<8x32xf32>, vector<16x32xf32> -> vector<16x32xf32>
    %39 = arith.addf %34, %38 : vector<16x32xf32>
    %40 = vector.broadcast %7 : vector<1x32xf32> to vector<16x32xf32>
    %41 = arith.addf %39, %40 : vector<16x32xf32>
    %cst_67 = arith.constant dense<0.000000e+00> : vector<32xf32>
    %42 = vector.multi_reduction <add>, %41, %cst_67 [0] : vector<16x32xf32> to vector<32xf32>
    %43 = vector.shape_cast %42 : vector<32xf32> to vector<1x32xf32>
    %cst_68 = arith.constant 1.600000e+01 : f32
    %44 = vector.broadcast %cst_68 : f32 to vector<1x32xf32>
    %45 = arith.divf %43, %44 : vector<1x32xf32>
    %46 = vector.broadcast %45 : vector<1x32xf32> to vector<16x32xf32>
    %47 = arith.subf %41, %46 : vector<16x32xf32>
    %48 = arith.mulf %47, %47 : vector<16x32xf32>
    %cst_69 = arith.constant dense<0.000000e+00> : vector<32xf32>
    %49 = vector.multi_reduction <add>, %48, %cst_69 [0] : vector<16x32xf32> to vector<32xf32>
    %50 = vector.shape_cast %49 : vector<32xf32> to vector<1x32xf32>
    %cst_70 = arith.constant 1.600000e+01 : f32
    %51 = vector.broadcast %cst_70 : f32 to vector<1x32xf32>
    %52 = arith.divf %50, %51 : vector<1x32xf32>
    %53 = vector.broadcast %45 : vector<1x32xf32> to vector<16x32xf32>
    %54 = arith.subf %41, %53 : vector<16x32xf32>
    %cst_71 = arith.constant 1.000000e+00 : f32
    %55 = vector.broadcast %cst_71 : f32 to vector<1x32xf32>
    %56 = arith.addf %52, %55 : vector<1x32xf32>
    %57 = math.rsqrt %56 : vector<1x32xf32>
    %58 = vector.broadcast %57 : vector<1x32xf32> to vector<16x32xf32>
    %59 = arith.mulf %54, %58 : vector<16x32xf32>
    %60 = vector.broadcast %11 : vector<1x32xf32> to vector<16x32xf32>
    %61 = arith.mulf %60, %59 : vector<16x32xf32>
    %62 = vector.broadcast %9 : vector<1x32xf32> to vector<16x32xf32>
    %63 = arith.addf %61, %62 : vector<16x32xf32>
    %cst_72 = arith.constant 0.000000e+00 : f32
    %64 = vector.broadcast %cst_72 : f32 to vector<16x32xf32>
    %65 = arith.cmpf oge, %63, %64 : vector<16x32xf32>
    %cst_73 = arith.constant 0.00999999977 : f32
    %66 = vector.broadcast %cst_73 : f32 to vector<16x32xf32>
    %67 = arith.mulf %66, %63 : vector<16x32xf32>
    %68 = arith.select %65, %63, %67 : vector<16x32xi1>, vector<16x32xf32>
    %cst_74 = arith.constant dense<0.000000e+00> : vector<24x32xf32>
    %69 = tpu.matmul %30, %14, %cst_74 {dimension_numbers = #tpu.dot_dimension_numbers<[1], [0], [0], [1], [0, 0, 1, 1], [], []>} : vector<24x16xf32>, vector<16x32xf32>, vector<24x32xf32> -> vector<24x32xf32>
    %70 = arith.addf %37, %69 : vector<24x32xf32>
    %71 = vector.broadcast %8 : vector<1x32xf32> to vector<24x32xf32>
    %72 = arith.addf %70, %71 : vector<24x32xf32>
    %cst_75 = arith.constant dense<0.000000e+00> : vector<32xf32>
    %73 = vector.multi_reduction <add>, %72, %cst_75 [0] : vector<24x32xf32> to vector<32xf32>
    %74 = vector.shape_cast %73 : vector<32xf32> to vector<1x32xf32>
    %cst_76 = arith.constant 2.400000e+01 : f32
    %75 = vector.broadcast %cst_76 : f32 to vector<1x32xf32>
    %76 = arith.divf %74, %75 : vector<1x32xf32>
    %77 = vector.broadcast %76 : vector<1x32xf32> to vector<24x32xf32>
    %78 = arith.subf %72, %77 : vector<24x32xf32>
    %79 = arith.mulf %78, %78 : vector<24x32xf32>
    %cst_77 = arith.constant dense<0.000000e+00> : vector<32xf32>
    %80 = vector.multi_reduction <add>, %79, %cst_77 [0] : vector<24x32xf32> to vector<32xf32>
    %81 = vector.shape_cast %80 : vector<32xf32> to vector<1x32xf32>
    %cst_78 = arith.constant 2.400000e+01 : f32
    %82 = vector.broadcast %cst_78 : f32 to vector<1x32xf32>
    %83 = arith.divf %81, %82 : vector<1x32xf32>
    %84 = vector.broadcast %76 : vector<1x32xf32> to vector<24x32xf32>
    %85 = arith.subf %72, %84 : vector<24x32xf32>
    %cst_79 = arith.constant 1.000000e+00 : f32
    %86 = vector.broadcast %cst_79 : f32 to vector<1x32xf32>
    %87 = arith.addf %83, %86 : vector<1x32xf32>
    %88 = math.rsqrt %87 : vector<1x32xf32>
    %89 = vector.broadcast %88 : vector<1x32xf32> to vector<24x32xf32>
    %90 = arith.mulf %85, %89 : vector<24x32xf32>
    %91 = vector.broadcast %12 : vector<1x32xf32> to vector<24x32xf32>
    %92 = arith.mulf %91, %90 : vector<24x32xf32>
    %93 = vector.broadcast %10 : vector<1x32xf32> to vector<24x32xf32>
    %94 = arith.addf %92, %93 : vector<24x32xf32>
    %cst_80 = arith.constant 0.000000e+00 : f32
    %95 = vector.broadcast %cst_80 : f32 to vector<24x32xf32>
    %96 = arith.cmpf oge, %94, %95 : vector<24x32xf32>
    %cst_81 = arith.constant 0.00999999977 : f32
    %97 = vector.broadcast %cst_81 : f32 to vector<24x32xf32>
    %98 = arith.mulf %97, %94 : vector<24x32xf32>
    %99 = arith.select %96, %94, %98 : vector<24x32xi1>, vector<24x32xf32>
    %cst_82 = arith.constant dense<0.000000e+00> : vector<24x32xf32>
    %100 = tpu.matmul %0, %68, %cst_82 {dimension_numbers = #tpu.dot_dimension_numbers<[1], [0], [0], [1], [0, 0, 1, 1], [], []>} : vector<24x16xf32>, vector<16x32xf32>, vector<24x32xf32> -> vector<24x32xf32>
    %cst_83 = arith.constant dense<0.000000e+00> : vector<24x32xf32>
    %101 = tpu.matmul %100, %26, %cst_83 {dimension_numbers = #tpu.dot_dimension_numbers<[1], [0], [0], [1], [0, 0, 1, 1], [], []>} : vector<24x32xf32>, vector<32x32xf32>, vector<24x32xf32> -> vector<24x32xf32>
    %cst_84 = arith.constant dense<0.000000e+00> : vector<16x32xf32>
    %102 = tpu.matmul %1, %99, %cst_84 {dimension_numbers = #tpu.dot_dimension_numbers<[1], [0], [0], [1], [0, 0, 1, 1], [], []>} : vector<16x24xf32>, vector<24x32xf32>, vector<16x32xf32> -> vector<16x32xf32>
    %cst_85 = arith.constant dense<0.000000e+00> : vector<16x32xf32>
    %103 = tpu.matmul %102, %27, %cst_85 {dimension_numbers = #tpu.dot_dimension_numbers<[1], [0], [0], [1], [0, 0, 1, 1], [], []>} : vector<16x32xf32>, vector<32x32xf32>, vector<16x32xf32> -> vector<16x32xf32>
    %cst_86 = arith.constant dense<0.000000e+00> : vector<24x32xf32>
    %104 = tpu.matmul %2, %99, %cst_86 {dimension_numbers = #tpu.dot_dimension_numbers<[1], [0], [0], [1], [0, 0, 1, 1], [], []>} : vector<24x24xf32>, vector<24x32xf32>, vector<24x32xf32> -> vector<24x32xf32>
    %cst_87 = arith.constant dense<0.000000e+00> : vector<24x32xf32>
    %105 = tpu.matmul %104, %28, %cst_87 {dimension_numbers = #tpu.dot_dimension_numbers<[1], [0], [0], [1], [0, 0, 1, 1], [], []>} : vector<24x32xf32>, vector<32x32xf32>, vector<24x32xf32> -> vector<24x32xf32>
    %106 = arith.addf %101, %105 : vector<24x32xf32>
    %cst_88 = arith.constant dense<0.000000e+00> : vector<16x32xf32>
    %107 = tpu.matmul %68, %24, %cst_88 {dimension_numbers = #tpu.dot_dimension_numbers<[1], [0], [0], [1], [0, 0, 1, 1], [], []>} : vector<16x32xf32>, vector<32x32xf32>, vector<16x32xf32> -> vector<16x32xf32>
    %108 = arith.addf %103, %107 : vector<16x32xf32>
    %109 = vector.broadcast %18 : vector<1x32xf32> to vector<16x32xf32>
    %110 = arith.addf %108, %109 : vector<16x32xf32>
    %cst_89 = arith.constant dense<0.000000e+00> : vector<32xf32>
    %111 = vector.multi_reduction <add>, %110, %cst_89 [0] : vector<16x32xf32> to vector<32xf32>
    %112 = vector.shape_cast %111 : vector<32xf32> to vector<1x32xf32>
    %cst_90 = arith.constant 1.600000e+01 : f32
    %113 = vector.broadcast %cst_90 : f32 to vector<1x32xf32>
    %114 = arith.divf %112, %113 : vector<1x32xf32>
    %115 = vector.broadcast %114 : vector<1x32xf32> to vector<16x32xf32>
    %116 = arith.subf %110, %115 : vector<16x32xf32>
    %117 = arith.mulf %116, %116 : vector<16x32xf32>
    %cst_91 = arith.constant dense<0.000000e+00> : vector<32xf32>
    %118 = vector.multi_reduction <add>, %117, %cst_91 [0] : vector<16x32xf32> to vector<32xf32>
    %119 = vector.shape_cast %118 : vector<32xf32> to vector<1x32xf32>
    %cst_92 = arith.constant 1.600000e+01 : f32
    %120 = vector.broadcast %cst_92 : f32 to vector<1x32xf32>
    %121 = arith.divf %119, %120 : vector<1x32xf32>
    %122 = vector.broadcast %114 : vector<1x32xf32> to vector<16x32xf32>
    %123 = arith.subf %110, %122 : vector<16x32xf32>
    %cst_93 = arith.constant 1.000000e+00 : f32
    %124 = vector.broadcast %cst_93 : f32 to vector<1x32xf32>
    %125 = arith.addf %121, %124 : vector<1x32xf32>
    %126 = math.rsqrt %125 : vector<1x32xf32>
    %127 = vector.broadcast %126 : vector<1x32xf32> to vector<16x32xf32>
    %128 = arith.mulf %123, %127 : vector<16x32xf32>
    %129 = vector.broadcast %22 : vector<1x32xf32> to vector<16x32xf32>
    %130 = arith.mulf %129, %128 : vector<16x32xf32>
    %131 = vector.broadcast %20 : vector<1x32xf32> to vector<16x32xf32>
    %132 = arith.addf %130, %131 : vector<16x32xf32>
    %cst_94 = arith.constant 0.000000e+00 : f32
    %133 = vector.broadcast %cst_94 : f32 to vector<16x32xf32>
    %134 = arith.cmpf oge, %132, %133 : vector<16x32xf32>
    %cst_95 = arith.constant 0.00999999977 : f32
    %135 = vector.broadcast %cst_95 : f32 to vector<16x32xf32>
    %136 = arith.mulf %135, %132 : vector<16x32xf32>
    %137 = arith.select %134, %132, %136 : vector<16x32xi1>, vector<16x32xf32>
    %cst_96 = arith.constant dense<0.000000e+00> : vector<24x32xf32>
    %138 = tpu.matmul %99, %25, %cst_96 {dimension_numbers = #tpu.dot_dimension_numbers<[1], [0], [0], [1], [0, 0, 1, 1], [], []>} : vector<24x32xf32>, vector<32x32xf32>, vector<24x32xf32> -> vector<24x32xf32>
    %139 = arith.addf %106, %138 : vector<24x32xf32>
    %140 = vector.broadcast %19 : vector<1x32xf32> to vector<24x32xf32>
    %141 = arith.addf %139, %140 : vector<24x32xf32>
    %cst_97 = arith.constant dense<0.000000e+00> : vector<32xf32>
    %142 = vector.multi_reduction <add>, %141, %cst_97 [0] : vector<24x32xf32> to vector<32xf32>
    %143 = vector.shape_cast %142 : vector<32xf32> to vector<1x32xf32>
    %cst_98 = arith.constant 2.400000e+01 : f32
    %144 = vector.broadcast %cst_98 : f32 to vector<1x32xf32>
    %145 = arith.divf %143, %144 : vector<1x32xf32>
    %146 = vector.broadcast %145 : vector<1x32xf32> to vector<24x32xf32>
    %147 = arith.subf %141, %146 : vector<24x32xf32>
    %148 = arith.mulf %147, %147 : vector<24x32xf32>
    %cst_99 = arith.constant dense<0.000000e+00> : vector<32xf32>
    %149 = vector.multi_reduction <add>, %148, %cst_99 [0] : vector<24x32xf32> to vector<32xf32>
    %150 = vector.shape_cast %149 : vector<32xf32> to vector<1x32xf32>
    %cst_100 = arith.constant 2.400000e+01 : f32
    %151 = vector.broadcast %cst_100 : f32 to vector<1x32xf32>
    %152 = arith.divf %150, %151 : vector<1x32xf32>
    %153 = vector.broadcast %145 : vector<1x32xf32> to vector<24x32xf32>
    %154 = arith.subf %141, %153 : vector<24x32xf32>
    %cst_101 = arith.constant 1.000000e+00 : f32
    %155 = vector.broadcast %cst_101 : f32 to vector<1x32xf32>
    %156 = arith.addf %152, %155 : vector<1x32xf32>
    %157 = math.rsqrt %156 : vector<1x32xf32>
    %158 = vector.broadcast %157 : vector<1x32xf32> to vector<24x32xf32>
    %159 = arith.mulf %154, %158 : vector<24x32xf32>
    %160 = vector.broadcast %23 : vector<1x32xf32> to vector<24x32xf32>
    %161 = arith.mulf %160, %159 : vector<24x32xf32>
    %162 = vector.broadcast %21 : vector<1x32xf32> to vector<24x32xf32>
    %163 = arith.addf %161, %162 : vector<24x32xf32>
    %cst_102 = arith.constant 0.000000e+00 : f32
    %164 = vector.broadcast %cst_102 : f32 to vector<24x32xf32>
    %165 = arith.cmpf oge, %163, %164 : vector<24x32xf32>
    %cst_103 = arith.constant 0.00999999977 : f32
    %166 = vector.broadcast %cst_103 : f32 to vector<24x32xf32>
    %167 = arith.mulf %166, %163 : vector<24x32xf32>
    %168 = arith.select %165, %163, %167 : vector<24x32xi1>, vector<24x32xf32>
    %cst_104 = arith.constant dense<0.000000e+00> : vector<16x1xf32>
    %169 = tpu.matmul %137, %4, %cst_104 {dimension_numbers = #tpu.dot_dimension_numbers<[1], [0], [0], [1], [0, 0, 1, 1], [], []>} : vector<16x32xf32>, vector<32x1xf32>, vector<16x1xf32> -> vector<16x1xf32>
    %170 = vector.broadcast %3 : vector<1x1xf32> to vector<16x1xf32>
    %171 = arith.addf %169, %170 : vector<16x1xf32>
    %c0_105 = arith.constant 0 : index
    %c0_106 = arith.constant 0 : index
    %172 = vector.load %arg31[%c0_105, %c0_106] : memref<16x1xf32, #tpu.memory_space<vmem>>, vector<16x1xf32>
    tpu.vector_store %arg31[%c0_105, %c0_106], %171 {strides = array<i32>} : memref<16x1xf32, #tpu.memory_space<vmem>>, vector<16x1xf32>,
    %cst_107 = arith.constant dense<0.000000e+00> : vector<24x1xf32>
    %173 = tpu.matmul %168, %6, %cst_107 {dimension_numbers = #tpu.dot_dimension_numbers<[1], [0], [0], [1], [0, 0, 1, 1], [], []>} : vector<24x32xf32>, vector<32x1xf32>, vector<24x1xf32> -> vector<24x1xf32>
    %174 = vector.broadcast %5 : vector<1x1xf32> to vector<24x1xf32>
    %175 = arith.addf %173, %174 : vector<24x1xf32>
    %c0_108 = arith.constant 0 : index
    %c0_109 = arith.constant 0 : index
    %176 = vector.load %arg32[%c0_108, %c0_109] : memref<24x1xf32, #tpu.memory_space<vmem>>, vector<24x1xf32>
    tpu.vector_store %arg32[%c0_108, %c0_109], %175 {strides = array<i32>} : memref<24x1xf32, #tpu.memory_space<vmem>>, vector<24x1xf32>,
    return
  }
}

</mosaic_0001>

<llo_original>
// kernel: tpu_custom_call.1
$region0: #{tpu_custom_call.1}
  #allocation0 [shape = 'u32[]', space=smem, size = 0x4, offset = 0x4, fixed_abs, tag = 'smem constant byte address 0x4 - core index']
  #allocation1 [shape = 'u32[144,128]{1,0:T(1,128)}', space=vmem, size = 0x12000, scoped, tag = 'internal scratch']
  #allocation2 [shape = 'f32[1,1]{1,0:T(1,128)S(1)}', space=vmem, size = 0x200, scoped, tag = 'scoped memory for tpu_custom_call.1']
  #allocation3 [shape = 'f32[1,1]{1,0:T(1,128)S(1)}', space=vmem, size = 0x200, scoped, tag = 'scoped memory for tpu_custom_call.1']
  %s0 = inlined_call_operand.smem [shape: u32[33], index: -1, kind: input, shape index: {}]
  %s1 = sld [smem:[%s0]]
  %s2 = scalar_lea.smem %s0, 1
  %s3 = sld [smem:[%s2]]
  %s4 = scalar_lea.smem %s0, 2
  %s5 = sld [smem:[%s4]]
  %s6 = scalar_lea.smem %s0, 3
  %s7 = sld [smem:[%s6]]
  %s8 = scalar_lea.smem %s0, 4
  %s9 = sld [smem:[%s8]]
  %s10 = scalar_lea.smem %s0, 5
  %s11 = sld [smem:[%s10]]
  %s12 = scalar_lea.smem %s0, 6
  %s13 = sld [smem:[%s12]]
  %s14 = scalar_lea.smem %s0, 7
  %s15 = sld [smem:[%s14]]
  %s16 = scalar_lea.smem %s0, 8
  %s17 = sld [smem:[%s16]]
  %s18 = scalar_lea.smem %s0, 9
  %s19 = sld [smem:[%s18]]
  %s20 = scalar_lea.smem %s0, 10
  %s21 = sld [smem:[%s20]]
  %s22 = scalar_lea.smem %s0, 11
  %s23 = sld [smem:[%s22]]
  %s24 = scalar_lea.smem %s0, 12
  %s25 = sld [smem:[%s24]]
  %s26 = scalar_lea.smem %s0, 13
  %s27 = sld [smem:[%s26]]
  %s28 = scalar_lea.smem %s0, 14
  %s29 = sld [smem:[%s28]]
  %s30 = scalar_lea.smem %s0, 15
  %s31 = sld [smem:[%s30]]
  %s32 = scalar_lea.smem %s0, 16
  %s33 = sld [smem:[%s32]]
  %s34 = scalar_lea.smem %s0, 17
  %s35 = sld [smem:[%s34]]
  %s36 = scalar_lea.smem %s0, 18
  %s37 = sld [smem:[%s36]]
  %s38 = scalar_lea.smem %s0, 19
  %s39 = sld [smem:[%s38]]
  %s40 = scalar_lea.smem %s0, 20
  %s41 = sld [smem:[%s40]]
  %s42 = scalar_lea.smem %s0, 21
  %s43 = sld [smem:[%s42]]
  %s44 = scalar_lea.smem %s0, 22
  %s45 = sld [smem:[%s44]]
  %s46 = scalar_lea.smem %s0, 23
  %s47 = sld [smem:[%s46]]
  %s48 = scalar_lea.smem %s0, 24
  %s49 = sld [smem:[%s48]]
  %s50 = scalar_lea.smem %s0, 25
  %s51 = sld [smem:[%s50]]
  %s52 = scalar_lea.smem %s0, 26
  %s53 = sld [smem:[%s52]]
  %s54 = scalar_lea.smem %s0, 27
  %s55 = sld [smem:[%s54]]
  %s56 = scalar_lea.smem %s0, 28
  %s57 = sld [smem:[%s56]]
  %s58 = scalar_lea.smem %s0, 29
  %s59 = sld [smem:[%s58]]
  %s60 = scalar_lea.smem %s0, 30
  %s61 = sld [smem:[%s60]]
  %s62 = scalar_lea.smem %s0, 31
  %s63 = sld [smem:[%s62]]
  %s64 = scalar_lea.smem %s0, 32
  %s65 = sld [smem:[%s64]]
  %66 = xla_tuple %s63, %s65
  %s67 = sld [smem:[#allocation0]]
  $region190: #{tpu_custom_call.1} parent=0
    _
  %s69 = ssub.s32 1, %s67
  %s70 = scalar_select 0, %s69, %s67
  %v71 = vstv %s7
  %72 = vst [vmem:[#allocation2] sm:$0x1] %v71
  %v73 = vstv %s11
  %74 = vst [vmem:[#allocation3] sm:$0x1] %v73
  $region1: #{tpu_custom_call.1} parent=0
    #allocation4 [shape = 'u8[8192]{0}', space=vmem, size = 0x2000, scoped, tag = 'input window, operand 1, single buffered']
    #allocation5 [shape = 's32[1]{0}', space=sflag, size = 0x4, scoped, tag = 'scoped memory for tpu_custom_call.1']
    #allocation6 [shape = 'u8[12288]{0}', space=vmem, size = 0x3000, scoped, tag = 'input window, operand 2, single buffered']
    #allocation7 [shape = 's32[1]{0}', space=sflag, size = 0x4, scoped, tag = 'scoped memory for tpu_custom_call.1']
    #allocation8 [shape = 'u8[512]{0}', space=vmem, size = 0x400, scoped, tag = 'input window, operand 7, single buffered']
    #allocation9 [shape = 'u8[512]{0}', space=vmem, size = 0x400, scoped, tag = 'input window, operand 8, single buffered']
    #allocation10 [shape = 's32[1]{0}', space=sflag, size = 0x4, scoped, tag = 'scoped memory for tpu_custom_call.1']
    #allocation11 [shape = 'u8[512]{0}', space=vmem, size = 0x400, scoped, tag = 'input window, operand 9, single buffered']
    #allocation12 [shape = 'u8[512]{0}', space=vmem, size = 0x400, scoped, tag = 'input window, operand 10, single buffered']
    #allocation13 [shape = 's32[1]{0}', space=sflag, size = 0x4, scoped, tag = 'scoped memory for tpu_custom_call.1']
    #allocation14 [shape = 'u8[512]{0}', space=vmem, size = 0x400, scoped, tag = 'input window, operand 11, single buffered']
    #allocation15 [shape = 'u8[512]{0}', space=vmem, size = 0x400, scoped, tag = 'input window, operand 12, single buffered']
    #allocation16 [shape = 's32[1]{0}', space=sflag, size = 0x4, scoped, tag = 'scoped memory for tpu_custom_call.1']
    #allocation17 [shape = 'u8[4096]{0}', space=vmem, size = 0x1000, scoped, tag = 'input window, operand 13, single buffered']
    #allocation18 [shape = 'u8[4096]{0}', space=vmem, size = 0x1000, scoped, tag = 'input window, operand 15, single buffered']
    #allocation19 [shape = 's32[1]{0}', space=sflag, size = 0x4, scoped, tag = 'scoped memory for tpu_custom_call.1']
    #allocation20 [shape = 'u8[8192]{0}', space=vmem, size = 0x2000, scoped, tag = 'input window, operand 16, single buffered']
    #allocation21 [shape = 'u8[8192]{0}', space=vmem, size = 0x2000, scoped, tag = 'input window, operand 17, single buffered']
    #allocation22 [shape = 's32[1]{0}', space=sflag, size = 0x4, scoped, tag = 'scoped memory for tpu_custom_call.1']
    %75 = vsyncpa [#allocation5], 0
    %76 = vsyncpa [#allocation7], 0
    %77 = vsyncpa [#allocation10], 0
    %78 = vsyncpa [#allocation13], 0
    %79 = vsyncpa [#allocation16], 0
    %80 = vsyncpa [#allocation19], 0
    %81 = vsyncpa [#allocation22], 0
    // Predicated region
    $region2: #{tpu_custom_call.1} parent=1 // pred_check
      _
    $region3: #{tpu_custom_call.1} parent=1 // pred_check_branch
      %83 = sbr.rel (0) target = $region5
    $region4: #{tpu_custom_call.1} parent=1 // pred_region
      _
    $region5: #{tpu_custom_call.1} parent=1 // pred_fallthru
      _
    // Predicated region
    $region6: #{tpu_custom_call.1} parent=1 // pred_check
      _
    $region7: #{tpu_custom_call.1} parent=1 // pred_check_branch
      %85 = sbr.rel (0) target = $region9
    $region8: #{tpu_custom_call.1} parent=1 // pred_region
      %s87 = ssub.s32 256, 256
      %88 = vsyncadd [#allocation5], %s87
      %s89 = sshll.u32 [#allocation4], 4
      %s90 = int_to_ptr.vmem [resolvable:$true] %s89
      %95 = dma.hbm_to_vmem [thread:$0]  %s3, 256, %s90, [#allocation5], 128, 128, 8
    $region9: #{tpu_custom_call.1} parent=1 // pred_fallthru
      _
    // Predicated region
    $region10: #{tpu_custom_call.1} parent=1 // pred_check
      _
    $region11: #{tpu_custom_call.1} parent=1 // pred_check_branch
      %97 = sbr.rel (0) target = $region13
    $region12: #{tpu_custom_call.1} parent=1 // pred_region
      %s99 = ssub.s32 384, 384
      %100 = vsyncadd [#allocation7], %s99
      %s101 = sshll.u32 [#allocation6], 4
      %s102 = int_to_ptr.vmem [resolvable:$true] %s101
      %107 = dma.hbm_to_vmem [thread:$0]  %s5, 384, %s102, [#allocation7], 128, 128, 8
    $region13: #{tpu_custom_call.1} parent=1 // pred_fallthru
      _
    // Predicated region
    $region14: #{tpu_custom_call.1} parent=1 // pred_check
      _
    $region15: #{tpu_custom_call.1} parent=1 // pred_check_branch
      %109 = sbr.rel (0) target = $region17
    $region16: #{tpu_custom_call.1} parent=1 // pred_region
      _
    $region17: #{tpu_custom_call.1} parent=1 // pred_fallthru
      _
    // Predicated region
    $region18: #{tpu_custom_call.1} parent=1 // pred_check
      _
    $region19: #{tpu_custom_call.1} parent=1 // pred_check_branch
      %111 = sbr.rel (0) target = $region21
    $region20: #{tpu_custom_call.1} parent=1 // pred_region
      _
    $region21: #{tpu_custom_call.1} parent=1 // pred_fallthru
      _
    // Predicated region
    $region22: #{tpu_custom_call.1} parent=1 // pred_check
      _
    $region23: #{tpu_custom_call.1} parent=1 // pred_check_branch
      %113 = sbr.rel (0) target = $region25
    $region24: #{tpu_custom_call.1} parent=1 // pred_region
      _
    $region25: #{tpu_custom_call.1} parent=1 // pred_fallthru
      _
    // Predicated region
    $region26: #{tpu_custom_call.1} parent=1 // pred_check
      _
    $region27: #{tpu_custom_call.1} parent=1 // pred_check_branch
      %115 = sbr.rel (0) target = $region29
    $region28: #{tpu_custom_call.1} parent=1 // pred_region
      _
    $region29: #{tpu_custom_call.1} parent=1 // pred_fallthru
      _
    // Predicated region
    $region30: #{tpu_custom_call.1} parent=1 // pred_check
      _
    $region31: #{tpu_custom_call.1} parent=1 // pred_check_branch
      %117 = sbr.rel (0) target = $region33
    $region32: #{tpu_custom_call.1} parent=1 // pred_region
      %s119 = ssub.s32 16, 16
      %120 = vsyncadd [#allocation7], %s119
      %s122 = sshll.u32 [#allocation8], 4
      %s123 = int_to_ptr.vmem [resolvable:$true] %s122
      %125 = dma.hbm_to_vmem [thread:$0]  %s15, 16, %s123, [#allocation7]
    $region33: #{tpu_custom_call.1} parent=1 // pred_fallthru
      _
    // Predicated region
    $region34: #{tpu_custom_call.1} parent=1 // pred_check
      _
    $region35: #{tpu_custom_call.1} parent=1 // pred_check_branch
      %127 = sbr.rel (0) target = $region37
    $region36: #{tpu_custom_call.1} parent=1 // pred_region
      %s129 = ssub.s32 16, 16
      %130 = vsyncadd [#allocation10], %s129
      %s132 = sshll.u32 [#allocation9], 4
      %s133 = int_to_ptr.vmem [resolvable:$true] %s132
      %135 = dma.hbm_to_vmem [thread:$0]  %s17, 16, %s133, [#allocation10]
    $region37: #{tpu_custom_call.1} parent=1 // pred_fallthru
      _
    // Predicated region
    $region38: #{tpu_custom_call.1} parent=1 // pred_check
      _
    $region39: #{tpu_custom_call.1} parent=1 // pred_check_branch
      %137 = sbr.rel (0) target = $region41
    $region40: #{tpu_custom_call.1} parent=1 // pred_region
      %s139 = ssub.s32 16, 16
      %140 = vsyncadd [#allocation10], %s139
      %s142 = sshll.u32 [#allocation11], 4
      %s143 = int_to_ptr.vmem [resolvable:$true] %s142
      %145 = dma.hbm_to_vmem [thread:$0]  %s19, 16, %s143, [#allocation10]
    $region41: #{tpu_custom_call.1} parent=1 // pred_fallthru
      _
    // Predicated region
    $region42: #{tpu_custom_call.1} parent=1 // pred_check
      _
    $region43: #{tpu_custom_call.1} parent=1 // pred_check_branch
      %147 = sbr.rel (0) target = $region45
    $region44: #{tpu_custom_call.1} parent=1 // pred_region
      %s149 = ssub.s32 16, 16
      %150 = vsyncadd [#allocation13], %s149
      %s152 = sshll.u32 [#allocation12], 4
      %s153 = int_to_ptr.vmem [resolvable:$true] %s152
      %155 = dma.hbm_to_vmem [thread:$0]  %s21, 16, %s153, [#allocation13]
    $region45: #{tpu_custom_call.1} parent=1 // pred_fallthru
      _
    // Predicated region
    $region46: #{tpu_custom_call.1} parent=1 // pred_check
      _
    $region47: #{tpu_custom_call.1} parent=1 // pred_check_branch
      %157 = sbr.rel (0) target = $region49
    $region48: #{tpu_custom_call.1} parent=1 // pred_region
      %s159 = ssub.s32 16, 16
      %160 = vsyncadd [#allocation13], %s159
      %s162 = sshll.u32 [#allocation14], 4
      %s163 = int_to_ptr.vmem [resolvable:$true] %s162
      %165 = dma.hbm_to_vmem [thread:$0]  %s23, 16, %s163, [#allocation13]
    $region49: #{tpu_custom_call.1} parent=1 // pred_fallthru
      _
    // Predicated region
    $region50: #{tpu_custom_call.1} parent=1 // pred_check
      _
    $region51: #{tpu_custom_call.1} parent=1 // pred_check_branch
      %167 = sbr.rel (0) target = $region53
    $region52: #{tpu_custom_call.1} parent=1 // pred_region
      %s169 = ssub.s32 16, 16
      %170 = vsyncadd [#allocation16], %s169
      %s172 = sshll.u32 [#allocation15], 4
      %s173 = int_to_ptr.vmem [resolvable:$true] %s172
      %175 = dma.hbm_to_vmem [thread:$0]  %s25, 16, %s173, [#allocation16]
    $region53: #{tpu_custom_call.1} parent=1 // pred_fallthru
      _
    // Predicated region
    $region54: #{tpu_custom_call.1} parent=1 // pred_check
      _
    $region55: #{tpu_custom_call.1} parent=1 // pred_check_branch
      %177 = sbr.rel (0) target = $region57
    $region56: #{tpu_custom_call.1} parent=1 // pred_region
      %s179 = ssub.s32 128, 128
      %180 = vsyncadd [#allocation16], %s179
      %s182 = sshll.u32 [#allocation17], 4
      %s183 = int_to_ptr.vmem [resolvable:$true] %s182
      %185 = dma.hbm_to_vmem [thread:$0]  %s27, 128, %s183, [#allocation16]
    $region57: #{tpu_custom_call.1} parent=1 // pred_fallthru
      _
    // Predicated region
    $region58: #{tpu_custom_call.1} parent=1 // pred_check
      _
    $region59: #{tpu_custom_call.1} parent=1 // pred_check_branch
      %187 = sbr.rel (0) target = $region61
    $region60: #{tpu_custom_call.1} parent=1 // pred_region
      _
    $region61: #{tpu_custom_call.1} parent=1 // pred_fallthru
      _
    // Predicated region
    $region62: #{tpu_custom_call.1} parent=1 // pred_check
      _
    $region63: #{tpu_custom_call.1} parent=1 // pred_check_branch
      %189 = sbr.rel (0) target = $region65
    $region64: #{tpu_custom_call.1} parent=1 // pred_region
      %s191 = ssub.s32 128, 128
      %192 = vsyncadd [#allocation19], %s191
      %s194 = sshll.u32 [#allocation18], 4
      %s195 = int_to_ptr.vmem [resolvable:$true] %s194
      %197 = dma.hbm_to_vmem [thread:$0]  %s31, 128, %s195, [#allocation19]
    $region65: #{tpu_custom_call.1} parent=1 // pred_fallthru
      _
    // Predicated region
    $region66: #{tpu_custom_call.1} parent=1 // pred_check
      _
    $region67: #{tpu_custom_call.1} parent=1 // pred_check_branch
      %199 = sbr.rel (0) target = $region69
    $region68: #{tpu_custom_call.1} parent=1 // pred_region
      %s201 = ssub.s32 256, 256
      %202 = vsyncadd [#allocation19], %s201
      %s203 = sshll.u32 [#allocation20], 4
      %s204 = int_to_ptr.vmem [resolvable:$true] %s203
      %209 = dma.hbm_to_vmem [thread:$0]  %s33, 256, %s204, [#allocation19], 128, 128, 8
    $region69: #{tpu_custom_call.1} parent=1 // pred_fallthru
      _
    // Predicated region
    $region70: #{tpu_custom_call.1} parent=1 // pred_check
      _
    $region71: #{tpu_custom_call.1} parent=1 // pred_check_branch
      %211 = sbr.rel (0) target = $region73
    $region72: #{tpu_custom_call.1} parent=1 // pred_region
      %s213 = ssub.s32 256, 256
      %214 = vsyncadd [#allocation22], %s213
      %s215 = sshll.u32 [#allocation21], 4
      %s216 = int_to_ptr.vmem [resolvable:$true] %s215
      %221 = dma.hbm_to_vmem [thread:$0]  %s35, 256, %s216, [#allocation22], 128, 128, 8
    $region73: #{tpu_custom_call.1} parent=1 // pred_fallthru
      _
    // Predicated region
    $region74: #{tpu_custom_call.1} parent=1 // pred_check
      _
    $region75: #{tpu_custom_call.1} parent=1 // pred_check_branch
      %223 = sbr.rel (0) target = $region77
    $region76: #{tpu_custom_call.1} parent=1 // pred_region
      _
    $region77: #{tpu_custom_call.1} parent=1 // pred_fallthru
      _
    // Predicated region
    $region78: #{tpu_custom_call.1} parent=1 // pred_check
      _
    $region79: #{tpu_custom_call.1} parent=1 // pred_check_branch
      %225 = sbr.rel (0) target = $region81
    $region80: #{tpu_custom_call.1} parent=1 // pred_region
      _
    $region81: #{tpu_custom_call.1} parent=1 // pred_fallthru
      _
    // Predicated region
    $region82: #{tpu_custom_call.1} parent=1 // pred_check
      _
    $region83: #{tpu_custom_call.1} parent=1 // pred_check_branch
      %227 = sbr.rel (0) target = $region85
    $region84: #{tpu_custom_call.1} parent=1 // pred_region
      _
    $region85: #{tpu_custom_call.1} parent=1 // pred_fallthru
      _
    // Predicated region
    $region86: #{tpu_custom_call.1} parent=1 // pred_check
      _
    $region87: #{tpu_custom_call.1} parent=1 // pred_check_branch
      %229 = sbr.rel (0) target = $region89
    $region88: #{tpu_custom_call.1} parent=1 // pred_region
      _
    $region89: #{tpu_custom_call.1} parent=1 // pred_fallthru
      _
    // Predicated region
    $region90: #{tpu_custom_call.1} parent=1 // pred_check
      _
    $region91: #{tpu_custom_call.1} parent=1 // pred_check_branch
      %231 = sbr.rel (0) target = $region93
    $region92: #{tpu_custom_call.1} parent=1 // pred_region
      _
    $region93: #{tpu_custom_call.1} parent=1 // pred_fallthru
      _
    // Predicated region
    $region94: #{tpu_custom_call.1} parent=1 // pred_check
      _
    $region95: #{tpu_custom_call.1} parent=1 // pred_check_branch
      %233 = sbr.rel (0) target = $region97
    $region96: #{tpu_custom_call.1} parent=1 // pred_region
      _
    $region97: #{tpu_custom_call.1} parent=1 // pred_fallthru
      _
    // Predicated region
    $region98: #{tpu_custom_call.1} parent=1 // pred_check
      _
    $region99: #{tpu_custom_call.1} parent=1 // pred_check_branch
      %235 = sbr.rel (0) target = $region101
    $region100: #{tpu_custom_call.1} parent=1 // pred_region
      _
    $region101: #{tpu_custom_call.1} parent=1 // pred_fallthru
      _
    // Predicated region
    $region102: #{tpu_custom_call.1} parent=1 // pred_check
      _
    $region103: #{tpu_custom_call.1} parent=1 // pred_check_branch
      %237 = sbr.rel (0) target = $region105
    $region104: #{tpu_custom_call.1} parent=1 // pred_region
      _
    $region105: #{tpu_custom_call.1} parent=1 // pred_fallthru
      _
    // Predicated region
    $region106: #{tpu_custom_call.1} parent=1 // pred_check
      _
    $region107: #{tpu_custom_call.1} parent=1 // pred_check_branch
      %239 = sbr.rel (0) target = $region109
    $region108: #{tpu_custom_call.1} parent=1 // pred_region
      _
    $region109: #{tpu_custom_call.1} parent=1 // pred_fallthru
      _
    // Predicated region
    $region110: #{tpu_custom_call.1} parent=1 // pred_check
      _
    $region111: #{tpu_custom_call.1} parent=1 // pred_check_branch
      %241 = sbr.rel (0) target = $region113
    $region112: #{tpu_custom_call.1} parent=1 // pred_region
      _
    $region113: #{tpu_custom_call.1} parent=1 // pred_fallthru
      _
    // Predicated region
    $region114: #{tpu_custom_call.1} parent=1 // pred_check
      _
    $region115: #{tpu_custom_call.1} parent=1 // pred_check_branch
      %243 = sbr.rel (0) target = $region117
    $region116: #{tpu_custom_call.1} parent=1 // pred_region
      _
    $region117: #{tpu_custom_call.1} parent=1 // pred_fallthru
      _
    // Predicated region
    $region118: #{tpu_custom_call.1} parent=1 // pred_check
      _
    $region119: #{tpu_custom_call.1} parent=1 // pred_check_branch
      %245 = sbr.rel (0) target = $region121
    $region120: #{tpu_custom_call.1} parent=1 // pred_region
      _
    $region121: #{tpu_custom_call.1} parent=1 // pred_fallthru
      _
    // Predicated region
    $region122: #{tpu_custom_call.1} parent=1 // pred_check
      _
    $region123: #{tpu_custom_call.1} parent=1 // pred_check_branch
      %247 = sbr.rel (0) target = $region125
    $region124: #{tpu_custom_call.1} parent=1 // pred_region
      _
    $region125: #{tpu_custom_call.1} parent=1 // pred_fallthru
      _
    // Predicated region
    $region126: #{tpu_custom_call.1} parent=1 // pred_check
      _
    $region127: #{tpu_custom_call.1} parent=1 // pred_check_branch
      %249 = sbr.rel (0) target = $region129
    $region128: #{tpu_custom_call.1} parent=1 // pred_region
      %250 = dma.done [#allocation5], 256
    $region129: #{tpu_custom_call.1} parent=1 // pred_fallthru
      _
    // Predicated region
    $region130: #{tpu_custom_call.1} parent=1 // pred_check
      _
    $region131: #{tpu_custom_call.1} parent=1 // pred_check_branch
      %252 = sbr.rel (0) target = $region133
    $region132: #{tpu_custom_call.1} parent=1 // pred_region
      %253 = dma.done [#allocation7], 384
    $region133: #{tpu_custom_call.1} parent=1 // pred_fallthru
      _
    // Predicated region
    $region134: #{tpu_custom_call.1} parent=1 // pred_check
      _
    $region135: #{tpu_custom_call.1} parent=1 // pred_check_branch
      %255 = sbr.rel (0) target = $region137
    $region136: #{tpu_custom_call.1} parent=1 // pred_region
      %256 = dma.done [#allocation7], 16
    $region137: #{tpu_custom_call.1} parent=1 // pred_fallthru
      _
    // Predicated region
    $region138: #{tpu_custom_call.1} parent=1 // pred_check
      _
    $region139: #{tpu_custom_call.1} parent=1 // pred_check_branch
      %258 = sbr.rel (0) target = $region141
    $region140: #{tpu_custom_call.1} parent=1 // pred_region
      %259 = dma.done [#allocation10], 16
    $region141: #{tpu_custom_call.1} parent=1 // pred_fallthru
      _
    // Predicated region
    $region142: #{tpu_custom_call.1} parent=1 // pred_check
      _
    $region143: #{tpu_custom_call.1} parent=1 // pred_check_branch
      %261 = sbr.rel (0) target = $region145
    $region144: #{tpu_custom_call.1} parent=1 // pred_region
      %262 = dma.done [#allocation10], 16
    $region145: #{tpu_custom_call.1} parent=1 // pred_fallthru
      _
    // Predicated region
    $region146: #{tpu_custom_call.1} parent=1 // pred_check
      _
    $region147: #{tpu_custom_call.1} parent=1 // pred_check_branch
      %264 = sbr.rel (0) target = $region149
    $region148: #{tpu_custom_call.1} parent=1 // pred_region
      %265 = dma.done [#allocation13], 16
    $region149: #{tpu_custom_call.1} parent=1 // pred_fallthru
      _
    // Predicated region
    $region150: #{tpu_custom_call.1} parent=1 // pred_check
      _
    $region151: #{tpu_custom_call.1} parent=1 // pred_check_branch
      %267 = sbr.rel (0) target = $region153
    $region152: #{tpu_custom_call.1} parent=1 // pred_region
      %268 = dma.done [#allocation13], 16
    $region153: #{tpu_custom_call.1} parent=1 // pred_fallthru
      _
    // Predicated region
    $region154: #{tpu_custom_call.1} parent=1 // pred_check
      _
    $region155: #{tpu_custom_call.1} parent=1 // pred_check_branch
      %270 = sbr.rel (0) target = $region157
    $region156: #{tpu_custom_call.1} parent=1 // pred_region
      %271 = dma.done [#allocation16], 16
    $region157: #{tpu_custom_call.1} parent=1 // pred_fallthru
      _
    // Predicated region
    $region158: #{tpu_custom_call.1} parent=1 // pred_check
      _
    $region159: #{tpu_custom_call.1} parent=1 // pred_check_branch
      %273 = sbr.rel (0) target = $region161
    $region160: #{tpu_custom_call.1} parent=1 // pred_region
      %274 = dma.done [#allocation16], 128
    $region161: #{tpu_custom_call.1} parent=1 // pred_fallthru
      _
    // Predicated region
    $region162: #{tpu_custom_call.1} parent=1 // pred_check
      _
    $region163: #{tpu_custom_call.1} parent=1 // pred_check_branch
      %276 = sbr.rel (0) target = $region165
    $region164: #{tpu_custom_call.1} parent=1 // pred_region
      %277 = dma.done [#allocation19], 128
    $region165: #{tpu_custom_call.1} parent=1 // pred_fallthru
      _
    // Predicated region
    $region166: #{tpu_custom_call.1} parent=1 // pred_check
      _
    $region167: #{tpu_custom_call.1} parent=1 // pred_check_branch
      %279 = sbr.rel (0) target = $region169
    $region168: #{tpu_custom_call.1} parent=1 // pred_region
      %280 = dma.done [#allocation19], 256
    $region169: #{tpu_custom_call.1} parent=1 // pred_fallthru
      _
    // Predicated region
    $region170: #{tpu_custom_call.1} parent=1 // pred_check
      _
    $region171: #{tpu_custom_call.1} parent=1 // pred_check_branch
      %282 = sbr.rel (0) target = $region173
    $region172: #{tpu_custom_call.1} parent=1 // pred_region
      %283 = dma.done [#allocation22], 256
    $region173: #{tpu_custom_call.1} parent=1 // pred_fallthru
      _
    %v284 = vld [vmem:[%s1] sm:$0xff]
    %v285 = vld [vmem:[%s1 + $0x8] sm:$0xff]
    %v286 = vld [vmem:[%s1 + $0x10] sm:$0xff]
    %v287 = vld [vmem:[#allocation4] sm:$0xff]
    %v288 = vld [vmem:[#allocation4 + $0x8] sm:$0xff]
    %v289 = vld [vmem:[#allocation6] sm:$0xff]
    %v290 = vld [vmem:[#allocation6 + $0x8] sm:$0xff]
    %v291 = vld [vmem:[#allocation6 + $0x10] sm:$0xff]
    %v292 = vld [vmem:[#allocation2] sm:$0x1]
    %v293 = vld [vmem:[%s9] sm:$0xff]
    %v294 = vld [vmem:[%s9 + $0x8] sm:$0xff]
    %v295 = vld [vmem:[%s9 + $0x10] sm:$0xff]
    %v296 = vld [vmem:[%s9 + $0x18] sm:$0xff]
    %v297 = vld [vmem:[#allocation3] sm:$0x1]
    %v298 = vld [vmem:[%s13] sm:$0xff]
    %v299 = vld [vmem:[%s13 + $0x8] sm:$0xff]
    %v300 = vld [vmem:[%s13 + $0x10] sm:$0xff]
    %v301 = vld [vmem:[%s13 + $0x18] sm:$0xff]
    %v302 = vld [vmem:[#allocation8] sm:$0x1]
    %v303 = vld [vmem:[#allocation9] sm:$0x1]
    %v304 = vld [vmem:[#allocation11] sm:$0x1]
    %v305 = vld [vmem:[#allocation12] sm:$0x1]
    %v306 = vld [vmem:[#allocation14] sm:$0x1]
    %v307 = vld [vmem:[#allocation15] sm:$0x1]
    %v308 = vld [vmem:[#allocation17] sm:$0xff]
    %v309 = vld [vmem:[%s29] sm:$0xff]
    %v310 = vld [vmem:[%s29 + $0x8] sm:$0xff]
    %v311 = vld [vmem:[#allocation18] sm:$0xff]
    %v312 = vld [vmem:[#allocation20] sm:$0xff]
    %v313 = vld [vmem:[#allocation20 + $0x8] sm:$0xff]
    %v314 = vld [vmem:[#allocation21] sm:$0xff]
    %v315 = vld [vmem:[#allocation21 + $0x8] sm:$0xff]
    %v316 = vld [vmem:[%s37] sm:$0x1]
    %v317 = vld [vmem:[%s39] sm:$0x1]
    %v318 = vld [vmem:[%s41] sm:$0x1]
    %v319 = vld [vmem:[%s43] sm:$0x1]
    %v320 = vld [vmem:[%s45] sm:$0x1]
    %v321 = vld [vmem:[%s47] sm:$0x1]
    %v322 = vld [vmem:[%s49] sm:$0xff]
    %v323 = vld [vmem:[%s49 + $0x8] sm:$0xff]
    %v324 = vld [vmem:[%s49 + $0x10] sm:$0xff]
    %v325 = vld [vmem:[%s49 + $0x18] sm:$0xff]
    %v326 = vld [vmem:[%s51] sm:$0xff]
    %v327 = vld [vmem:[%s51 + $0x8] sm:$0xff]
    %v328 = vld [vmem:[%s51 + $0x10] sm:$0xff]
    %v329 = vld [vmem:[%s51 + $0x18] sm:$0xff]
    %v330 = vld [vmem:[%s53] sm:$0xff]
    %v331 = vld [vmem:[%s53 + $0x8] sm:$0xff]
    %v332 = vld [vmem:[%s53 + $0x10] sm:$0xff]
    %v333 = vld [vmem:[%s53 + $0x18] sm:$0xff]
    %v334 = vld [vmem:[%s55] sm:$0xff]
    %v335 = vld [vmem:[%s55 + $0x8] sm:$0xff]
    %v336 = vld [vmem:[%s55 + $0x10] sm:$0xff]
    %v337 = vld [vmem:[%s55 + $0x18] sm:$0xff]
    %v338 = vld [vmem:[%s57] sm:$0xff]
    %v339 = vld [vmem:[%s57 + $0x8] sm:$0xff]
    %v340 = vld [vmem:[%s57 + $0x10] sm:$0xff]
    %v341 = vld [vmem:[%s57 + $0x18] sm:$0xff]
    %v342 = vld [vmem:[%s59] sm:$0xff]
    %v343 = vld [vmem:[%s59 + $0x8] sm:$0xff]
    %v344 = vld [vmem:[%s61] sm:$0xff]
    %v345 = vld [vmem:[%s61 + $0x8] sm:$0xff]
    %v346 = vld [vmem:[%s61 + $0x10] sm:$0xff]
    %vm347 = vcmask 130048
    %v349 = vsel %vm347, %v284, 0
    %v352 = vsel %vm347, %v285, 0
    %v355 = vsel %vm347, %v286, 0
    %357 = vmatprep.subr.mxu0 0.0
    %358 = vmatpush1.msra.mxu0 0.0
    %359 = vmatprep.subr.mxu0 0.0
    %360 = vmatpush1.msra.mxu0 0.0
    %361 = vmatprep.subr.mxu0 0.0
    %362 = vmatpush1.msra.mxu0 0.0
    %363 = vmatprep.subr.mxu0 0.0
    %364 = vmatpush1.msra.mxu0 0.0
    %365 = vmatprep.subr.mxu0 0.0
    %366 = vmatpush1.msra.mxu0 0.0
    %367 = vmatprep.subr.mxu0 0.0
    %368 = vmatpush1.msra.mxu0 0.0
    %369 = vmatprep.subr.mxu0 0.0
    %370 = vmatpush1.msra.mxu0 0.0
    %371 = vmatprep.subr.mxu0 0.0
    %372 = vmatpush1.msra.mxu0 0.0
    %373 = vmatprep.subr.mxu0 0.0
    %374 = vmatpush1.msra.mxu0 0.0
    %375 = vmatprep.subr.mxu0 0.0
    %376 = vmatpush1.msra.mxu0 0.0
    %377 = vmatprep.subr.mxu0 0.0
    %378 = vmatpush1.msra.mxu0 0.0
    %379 = vmatprep.subr.mxu0 0.0
    %380 = vmatpush1.msra.mxu0 0.0
    %381 = vmatprep.subr.mxu0 0.0
    %382 = vmatpush1.msra.mxu0 0.0
    %383 = vmatprep.subr.mxu0 0.0
    %384 = vmatpush1.msra.mxu0 0.0
    %385 = vmatprep.subr.mxu0 0.0
    %386 = vmatpush1.msra.mxu0 %v343
    %387 = vmatprep.subr.mxu0 0.0
    %388 = vmatpush1.msra.mxu0 %v342
    %389 = vmatprep.subr.mxu0 0.0
    %390 = vmatpush2.msra.mxu0 0.0
    %391 = vmatprep.subr.mxu0 0.0
    %392 = vmatpush2.msra.mxu0 0.0
    %393 = vmatprep.subr.mxu0 0.0
    %394 = vmatpush2.msra.mxu0 0.0
    %395 = vmatprep.subr.mxu0 0.0
    %396 = vmatpush2.msra.mxu0 0.0
    %397 = vmatprep.subr.mxu0 0.0
    %398 = vmatpush2.msra.mxu0 0.0
    %399 = vmatprep.subr.mxu0 0.0
    %400 = vmatpush2.msra.mxu0 0.0
    %401 = vmatprep.subr.mxu0 0.0
    %402 = vmatpush2.msra.mxu0 0.0
    %403 = vmatprep.subr.mxu0 0.0
    %404 = vmatpush2.msra.mxu0 0.0
    %405 = vmatprep.subr.mxu0 0.0
    %406 = vmatpush2.msra.mxu0 0.0
    %407 = vmatprep.subr.mxu0 0.0
    %408 = vmatpush2.msra.mxu0 0.0
    %409 = vmatprep.subr.mxu0 0.0
    %410 = vmatpush2.msra.mxu0 0.0
    %411 = vmatprep.subr.mxu0 0.0
    %412 = vmatpush2.msra.mxu0 0.0
    %413 = vmatprep.subr.mxu0 0.0
    %414 = vmatpush2.msra.mxu0 0.0
    %415 = vmatprep.subr.mxu0 0.0
    %416 = vmatpush2.msra.mxu0 0.0
    %417 = vmatprep.subr.mxu0 0.0
    %418 = vmatpush2.msra.mxu0 0.0
    %419 = vmatprep.subr.mxu0 0.0
    %420 = vmatpush2.msra.mxu0 0.0
    %421 = vmatprep.mubr.f32.mxu0 0.0
    %422 = vmatmul.mubr.f32.gmra.mxu0 %v349
    %v423 = vpop.f32.mrf.mxu0
    %v424 = vadd.f32 0.0, %v423
    %v425 = vpop.f32.mrf.mxu0
    %426 = vmatprep.mubr.f32.mxu0 0.0
    %427 = vmatmul.mubr.f32.gmra.mxu0 %v352
    %v428 = vpop.f32.mrf.mxu0
    %v429 = vadd.f32 0.0, %v428
    %v430 = vpop.f32.mrf.mxu0
    %431 = vmatprep.mubr.f32.mxu0 0.0
    %432 = vmatmul.mubr.f32.gmra.mxu0 %v355
    %v433 = vpop.f32.mrf.mxu0
    %v434 = vadd.f32 0.0, %v433
    %v435 = vpop.f32.mrf.mxu0
    %436 = vdwg.mxu0
    %vm437 = vcmask 195584
    %v439 = vsel %vm437, %v287, 0
    %v442 = vsel %vm437, %v288, 0
    %444 = vmatprep.subr.mxu0 0.0
    %445 = vmatpush1.msra.mxu0 0.0
    %446 = vmatprep.subr.mxu0 0.0
    %447 = vmatpush1.msra.mxu0 0.0
    %448 = vmatprep.subr.mxu0 0.0
    %449 = vmatpush1.msra.mxu0 0.0
    %450 = vmatprep.subr.mxu0 0.0
    %451 = vmatpush1.msra.mxu0 0.0
    %452 = vmatprep.subr.mxu0 0.0
    %453 = vmatpush1.msra.mxu0 0.0
    %454 = vmatprep.subr.mxu0 0.0
    %455 = vmatpush1.msra.mxu0 0.0
    %456 = vmatprep.subr.mxu0 0.0
    %457 = vmatpush1.msra.mxu0 0.0
    %458 = vmatprep.subr.mxu0 0.0
    %459 = vmatpush1.msra.mxu0 0.0
    %460 = vmatprep.subr.mxu0 0.0
    %461 = vmatpush1.msra.mxu0 0.0
    %462 = vmatprep.subr.mxu0 0.0
    %463 = vmatpush1.msra.mxu0 0.0
    %464 = vmatprep.subr.mxu0 0.0
    %465 = vmatpush1.msra.mxu0 0.0
    %466 = vmatprep.subr.mxu0 0.0
    %467 = vmatpush1.msra.mxu0 0.0
    %468 = vmatprep.subr.mxu0 0.0
    %469 = vmatpush1.msra.mxu0 0.0
    %470 = vmatprep.subr.mxu0 0.0
    %471 = vmatpush1.msra.mxu0 %v346
    %472 = vmatprep.subr.mxu0 0.0
    %473 = vmatpush1.msra.mxu0 %v345
    %474 = vmatprep.subr.mxu0 0.0
    %475 = vmatpush1.msra.mxu0 %v344
    %476 = vmatprep.subr.mxu0 0.0
    %477 = vmatpush2.msra.mxu0 0.0
    %478 = vmatprep.subr.mxu0 0.0
    %479 = vmatpush2.msra.mxu0 0.0
    %480 = vmatprep.subr.mxu0 0.0
    %481 = vmatpush2.msra.mxu0 0.0
    %482 = vmatprep.subr.mxu0 0.0
    %483 = vmatpush2.msra.mxu0 0.0
    %484 = vmatprep.subr.mxu0 0.0
    %485 = vmatpush2.msra.mxu0 0.0
    %486 = vmatprep.subr.mxu0 0.0
    %487 = vmatpush2.msra.mxu0 0.0
    %488 = vmatprep.subr.mxu0 0.0
    %489 = vmatpush2.msra.mxu0 0.0
    %490 = vmatprep.subr.mxu0 0.0
    %491 = vmatpush2.msra.mxu0 0.0
    %492 = vmatprep.subr.mxu0 0.0
    %493 = vmatpush2.msra.mxu0 0.0
    %494 = vmatprep.subr.mxu0 0.0
    %495 = vmatpush2.msra.mxu0 0.0
    %496 = vmatprep.subr.mxu0 0.0
    %497 = vmatpush2.msra.mxu0 0.0
    %498 = vmatprep.subr.mxu0 0.0
    %499 = vmatpush2.msra.mxu0 0.0
    %500 = vmatprep.subr.mxu0 0.0
    %501 = vmatpush2.msra.mxu0 0.0
    %502 = vmatprep.subr.mxu0 0.0
    %503 = vmatpush2.msra.mxu0 0.0
    %504 = vmatprep.subr.mxu0 0.0
    %505 = vmatpush2.msra.mxu0 0.0
    %506 = vmatprep.subr.mxu0 0.0
    %507 = vmatpush2.msra.mxu0 0.0
    %508 = vmatprep.mubr.f32.mxu0 0.0
    %509 = vmatmul.mubr.f32.gmra.mxu0 %v439
    %v510 = vpop.f32.mrf.mxu0
    %v511 = vadd.f32 0.0, %v510
    %v512 = vpop.f32.mrf.mxu0
    %513 = vmatprep.mubr.f32.mxu0 0.0
    %514 = vmatmul.mubr.f32.gmra.mxu0 %v442
    %v515 = vpop.f32.mrf.mxu0
    %v516 = vadd.f32 0.0, %v515
    %v517 = vpop.f32.mrf.mxu0
    %518 = vdwg.mxu0
    %v520 = vsel %vm437, %v289, 0
    %v523 = vsel %vm437, %v290, 0
    %v526 = vsel %vm437, %v291, 0
    %528 = vmatprep.subr.mxu0 0.0
    %529 = vmatpush1.msra.mxu0 0.0
    %530 = vmatprep.subr.mxu0 0.0
    %531 = vmatpush1.msra.mxu0 0.0
    %532 = vmatprep.subr.mxu0 0.0
    %533 = vmatpush1.msra.mxu0 0.0
    %534 = vmatprep.subr.mxu0 0.0
    %535 = vmatpush1.msra.mxu0 0.0
    %536 = vmatprep.subr.mxu0 0.0
    %537 = vmatpush1.msra.mxu0 0.0
    %538 = vmatprep.subr.mxu0 0.0
    %539 = vmatpush1.msra.mxu0 0.0
    %540 = vmatprep.subr.mxu0 0.0
    %541 = vmatpush1.msra.mxu0 0.0
    %542 = vmatprep.subr.mxu0 0.0
    %543 = vmatpush1.msra.mxu0 0.0
    %544 = vmatprep.subr.mxu0 0.0
    %545 = vmatpush1.msra.mxu0 0.0
    %546 = vmatprep.subr.mxu0 0.0
    %547 = vmatpush1.msra.mxu0 0.0
    %548 = vmatprep.subr.mxu0 0.0
    %549 = vmatpush1.msra.mxu0 0.0
    %550 = vmatprep.subr.mxu0 0.0
    %551 = vmatpush1.msra.mxu0 0.0
    %552 = vmatprep.subr.mxu0 0.0
    %553 = vmatpush1.msra.mxu0 0.0
    %554 = vmatprep.subr.mxu0 0.0
    %555 = vmatpush1.msra.mxu0 %v346
    %556 = vmatprep.subr.mxu0 0.0
    %557 = vmatpush1.msra.mxu0 %v345
    %558 = vmatprep.subr.mxu0 0.0
    %559 = vmatpush1.msra.mxu0 %v344
    %560 = vmatprep.subr.mxu0 0.0
    %561 = vmatpush2.msra.mxu0 0.0
    %562 = vmatprep.subr.mxu0 0.0
    %563 = vmatpush2.msra.mxu0 0.0
    %564 = vmatprep.subr.mxu0 0.0
    %565 = vmatpush2.msra.mxu0 0.0
    %566 = vmatprep.subr.mxu0 0.0
    %567 = vmatpush2.msra.mxu0 0.0
    %568 = vmatprep.subr.mxu0 0.0
    %569 = vmatpush2.msra.mxu0 0.0
    %570 = vmatprep.subr.mxu0 0.0
    %571 = vmatpush2.msra.mxu0 0.0
    %572 = vmatprep.subr.mxu0 0.0
    %573 = vmatpush2.msra.mxu0 0.0
    %574 = vmatprep.subr.mxu0 0.0
    %575 = vmatpush2.msra.mxu0 0.0
    %576 = vmatprep.subr.mxu0 0.0
    %577 = vmatpush2.msra.mxu0 0.0
    %578 = vmatprep.subr.mxu0 0.0
    %579 = vmatpush2.msra.mxu0 0.0
    %580 = vmatprep.subr.mxu0 0.0
    %581 = vmatpush2.msra.mxu0 0.0
    %582 = vmatprep.subr.mxu0 0.0
    %583 = vmatpush2.msra.mxu0 0.0
    %584 = vmatprep.subr.mxu0 0.0
    %585 = vmatpush2.msra.mxu0 0.0
    %586 = vmatprep.subr.mxu0 0.0
    %587 = vmatpush2.msra.mxu0 0.0
    %588 = vmatprep.subr.mxu0 0.0
    %589 = vmatpush2.msra.mxu0 0.0
    %590 = vmatprep.subr.mxu0 0.0
    %591 = vmatpush2.msra.mxu0 0.0
    %592 = vmatprep.mubr.f32.mxu0 0.0
    %593 = vmatmul.mubr.f32.gmra.mxu0 %v520
    %v594 = vpop.f32.mrf.mxu0
    %v595 = vadd.f32 0.0, %v594
    %v596 = vpop.f32.mrf.mxu0
    %597 = vmatprep.mubr.f32.mxu0 0.0
    %598 = vmatmul.mubr.f32.gmra.mxu0 %v523
    %v599 = vpop.f32.mrf.mxu0
    %v600 = vadd.f32 0.0, %v599
    %v601 = vpop.f32.mrf.mxu0
    %602 = vmatprep.mubr.f32.mxu0 0.0
    %603 = vmatmul.mubr.f32.gmra.mxu0 %v526
    %v604 = vpop.f32.mrf.mxu0
    %v605 = vadd.f32 0.0, %v604
    %v606 = vpop.f32.mrf.mxu0
    %607 = vdwg.mxu0
    %v609 = vsel %vm347, %v595, 0
    %v612 = vsel %vm347, %v600, 0
    %v615 = vsel %vm347, %v605, 0
    %617 = vmatprep.subr.mxu0 0.0
    %618 = vmatpush1.msra.mxu0 0.0
    %619 = vmatprep.subr.mxu0 0.0
    %620 = vmatpush1.msra.mxu0 0.0
    %621 = vmatprep.subr.mxu0 0.0
    %622 = vmatpush1.msra.mxu0 0.0
    %623 = vmatprep.subr.mxu0 0.0
    %624 = vmatpush1.msra.mxu0 0.0
    %625 = vmatprep.subr.mxu0 0.0
    %626 = vmatpush1.msra.mxu0 0.0
    %627 = vmatprep.subr.mxu0 0.0
    %628 = vmatpush1.msra.mxu0 0.0
    %629 = vmatprep.subr.mxu0 0.0
    %630 = vmatpush1.msra.mxu0 0.0
    %631 = vmatprep.subr.mxu0 0.0
    %632 = vmatpush1.msra.mxu0 0.0
    %633 = vmatprep.subr.mxu0 0.0
    %634 = vmatpush1.msra.mxu0 0.0
    %635 = vmatprep.subr.mxu0 0.0
    %636 = vmatpush1.msra.mxu0 0.0
    %637 = vmatprep.subr.mxu0 0.0
    %638 = vmatpush1.msra.mxu0 0.0
    %639 = vmatprep.subr.mxu0 0.0
    %640 = vmatpush1.msra.mxu0 0.0
    %641 = vmatprep.subr.mxu0 0.0
    %642 = vmatpush1.msra.mxu0 0.0
    %643 = vmatprep.subr.mxu0 0.0
    %644 = vmatpush1.msra.mxu0 0.0
    %645 = vmatprep.subr.mxu0 0.0
    %646 = vmatpush1.msra.mxu0 %v315
    %647 = vmatprep.subr.mxu0 0.0
    %648 = vmatpush1.msra.mxu0 %v314
    %649 = vmatprep.subr.mxu0 0.0
    %650 = vmatpush2.msra.mxu0 0.0
    %651 = vmatprep.subr.mxu0 0.0
    %652 = vmatpush2.msra.mxu0 0.0
    %653 = vmatprep.subr.mxu0 0.0
    %654 = vmatpush2.msra.mxu0 0.0
    %655 = vmatprep.subr.mxu0 0.0
    %656 = vmatpush2.msra.mxu0 0.0
    %657 = vmatprep.subr.mxu0 0.0
    %658 = vmatpush2.msra.mxu0 0.0
    %659 = vmatprep.subr.mxu0 0.0
    %660 = vmatpush2.msra.mxu0 0.0
    %661 = vmatprep.subr.mxu0 0.0
    %662 = vmatpush2.msra.mxu0 0.0
    %663 = vmatprep.subr.mxu0 0.0
    %664 = vmatpush2.msra.mxu0 0.0
    %665 = vmatprep.subr.mxu0 0.0
    %666 = vmatpush2.msra.mxu0 0.0
    %667 = vmatprep.subr.mxu0 0.0
    %668 = vmatpush2.msra.mxu0 0.0
    %669 = vmatprep.subr.mxu0 0.0
    %670 = vmatpush2.msra.mxu0 0.0
    %671 = vmatprep.subr.mxu0 0.0
    %672 = vmatpush2.msra.mxu0 0.0
    %673 = vmatprep.subr.mxu0 0.0
    %674 = vmatpush2.msra.mxu0 0.0
    %675 = vmatprep.subr.mxu0 0.0
    %676 = vmatpush2.msra.mxu0 0.0
    %677 = vmatprep.subr.mxu0 0.0
    %678 = vmatpush2.msra.mxu0 0.0
    %679 = vmatprep.subr.mxu0 0.0
    %680 = vmatpush2.msra.mxu0 0.0
    %681 = vmatprep.mubr.f32.mxu0 0.0
    %682 = vmatmul.mubr.f32.gmra.mxu0 %v609
    %v683 = vpop.f32.mrf.mxu0
    %v684 = vadd.f32 0.0, %v683
    %v685 = vpop.f32.mrf.mxu0
    %686 = vmatprep.mubr.f32.mxu0 0.0
    %687 = vmatmul.mubr.f32.gmra.mxu0 %v612
    %v688 = vpop.f32.mrf.mxu0
    %v689 = vadd.f32 0.0, %v688
    %v690 = vpop.f32.mrf.mxu0
    %691 = vmatprep.mubr.f32.mxu0 0.0
    %692 = vmatmul.mubr.f32.gmra.mxu0 %v615
    %v693 = vpop.f32.mrf.mxu0
    %v694 = vadd.f32 0.0, %v693
    %v695 = vpop.f32.mrf.mxu0
    %696 = vdwg.mxu0
    %vm697 = vcmask 64512
    %v699 = vsel %vm697, %v424, 0
    %v702 = vsel %vm697, %v429, 0
    %v705 = vsel %vm697, %v434, 0
    %707 = vmatprep.subr.mxu0 0.0
    %708 = vmatpush1.msra.mxu0 0.0
    %709 = vmatprep.subr.mxu0 0.0
    %710 = vmatpush1.msra.mxu0 0.0
    %711 = vmatprep.subr.mxu0 0.0
    %712 = vmatpush1.msra.mxu0 0.0
    %713 = vmatprep.subr.mxu0 0.0
    %714 = vmatpush1.msra.mxu0 0.0
    %715 = vmatprep.subr.mxu0 0.0
    %716 = vmatpush1.msra.mxu0 0.0
    %717 = vmatprep.subr.mxu0 0.0
    %718 = vmatpush1.msra.mxu0 0.0
    %719 = vmatprep.subr.mxu0 0.0
    %720 = vmatpush1.msra.mxu0 0.0
    %721 = vmatprep.subr.mxu0 0.0
    %722 = vmatpush1.msra.mxu0 0.0
    %723 = vmatprep.subr.mxu0 0.0
    %724 = vmatpush1.msra.mxu0 0.0
    %725 = vmatprep.subr.mxu0 0.0
    %726 = vmatpush1.msra.mxu0 0.0
    %727 = vmatprep.subr.mxu0 0.0
    %728 = vmatpush1.msra.mxu0 0.0
    %729 = vmatprep.subr.mxu0 0.0
    %730 = vmatpush1.msra.mxu0 0.0
    %731 = vmatprep.subr.mxu0 0.0
    %732 = vmatpush1.msra.mxu0 0.0
    %733 = vmatprep.subr.mxu0 0.0
    %734 = vmatpush1.msra.mxu0 0.0
    %735 = vmatprep.subr.mxu0 0.0
    %736 = vmatpush1.msra.mxu0 0.0
    %737 = vmatprep.subr.mxu0 0.0
    %738 = vmatpush1.msra.mxu0 %v311
    %739 = vmatprep.subr.mxu0 0.0
    %740 = vmatpush2.msra.mxu0 0.0
    %741 = vmatprep.subr.mxu0 0.0
    %742 = vmatpush2.msra.mxu0 0.0
    %743 = vmatprep.subr.mxu0 0.0
    %744 = vmatpush2.msra.mxu0 0.0
    %745 = vmatprep.subr.mxu0 0.0
    %746 = vmatpush2.msra.mxu0 0.0
    %747 = vmatprep.subr.mxu0 0.0
    %748 = vmatpush2.msra.mxu0 0.0
    %749 = vmatprep.subr.mxu0 0.0
    %750 = vmatpush2.msra.mxu0 0.0
    %751 = vmatprep.subr.mxu0 0.0
    %752 = vmatpush2.msra.mxu0 0.0
    %753 = vmatprep.subr.mxu0 0.0
    %754 = vmatpush2.msra.mxu0 0.0
    %755 = vmatprep.subr.mxu0 0.0
    %756 = vmatpush2.msra.mxu0 0.0
    %757 = vmatprep.subr.mxu0 0.0
    %758 = vmatpush2.msra.mxu0 0.0
    %759 = vmatprep.subr.mxu0 0.0
    %760 = vmatpush2.msra.mxu0 0.0
    %761 = vmatprep.subr.mxu0 0.0
    %762 = vmatpush2.msra.mxu0 0.0
    %763 = vmatprep.subr.mxu0 0.0
    %764 = vmatpush2.msra.mxu0 0.0
    %765 = vmatprep.subr.mxu0 0.0
    %766 = vmatpush2.msra.mxu0 0.0
    %767 = vmatprep.subr.mxu0 0.0
    %768 = vmatpush2.msra.mxu0 0.0
    %769 = vmatprep.subr.mxu0 0.0
    %770 = vmatpush2.msra.mxu0 0.0
    %771 = vmatprep.mubr.f32.mxu0 0.0
    %772 = vmatmul.mubr.f32.gmra.mxu0 %v699
    %v773 = vpop.f32.mrf.mxu0
    %v774 = vadd.f32 %v684, %v773
    %v775 = vpop.f32.mrf.mxu0
    %776 = vmatprep.mubr.f32.mxu0 0.0
    %777 = vmatmul.mubr.f32.gmra.mxu0 %v702
    %v778 = vpop.f32.mrf.mxu0
    %v779 = vadd.f32 %v689, %v778
    %v780 = vpop.f32.mrf.mxu0
    %781 = vmatprep.mubr.f32.mxu0 0.0
    %782 = vmatmul.mubr.f32.gmra.mxu0 %v705
    %v783 = vpop.f32.mrf.mxu0
    %v784 = vadd.f32 %v694, %v783
    %v785 = vpop.f32.mrf.mxu0
    %786 = vdwg.mxu0
    %v788 = vsel %vm697, %v342, 0
    %v791 = vsel %vm697, %v343, 0
    %793 = vmatprep.subr.mxu0 0.0
    %794 = vmatpush1.msra.mxu0 0.0
    %795 = vmatprep.subr.mxu0 0.0
    %796 = vmatpush1.msra.mxu0 0.0
    %797 = vmatprep.subr.mxu0 0.0
    %798 = vmatpush1.msra.mxu0 0.0
    %799 = vmatprep.subr.mxu0 0.0
    %800 = vmatpush1.msra.mxu0 0.0
    %801 = vmatprep.subr.mxu0 0.0
    %802 = vmatpush1.msra.mxu0 0.0
    %803 = vmatprep.subr.mxu0 0.0
    %804 = vmatpush1.msra.mxu0 0.0
    %805 = vmatprep.subr.mxu0 0.0
    %806 = vmatpush1.msra.mxu0 0.0
    %807 = vmatprep.subr.mxu0 0.0
    %808 = vmatpush1.msra.mxu0 0.0
    %809 = vmatprep.subr.mxu0 0.0
    %810 = vmatpush1.msra.mxu0 0.0
    %811 = vmatprep.subr.mxu0 0.0
    %812 = vmatpush1.msra.mxu0 0.0
    %813 = vmatprep.subr.mxu0 0.0
    %814 = vmatpush1.msra.mxu0 0.0
    %815 = vmatprep.subr.mxu0 0.0
    %816 = vmatpush1.msra.mxu0 0.0
    %817 = vmatprep.subr.mxu0 0.0
    %818 = vmatpush1.msra.mxu0 0.0
    %819 = vmatprep.subr.mxu0 0.0
    %820 = vmatpush1.msra.mxu0 0.0
    %821 = vmatprep.subr.mxu0 0.0
    %822 = vmatpush1.msra.mxu0 0.0
    %823 = vmatprep.subr.mxu0 0.0
    %824 = vmatpush1.msra.mxu0 %v308
    %825 = vmatprep.subr.mxu0 0.0
    %826 = vmatpush2.msra.mxu0 0.0
    %827 = vmatprep.subr.mxu0 0.0
    %828 = vmatpush2.msra.mxu0 0.0
    %829 = vmatprep.subr.mxu0 0.0
    %830 = vmatpush2.msra.mxu0 0.0
    %831 = vmatprep.subr.mxu0 0.0
    %832 = vmatpush2.msra.mxu0 0.0
    %833 = vmatprep.subr.mxu0 0.0
    %834 = vmatpush2.msra.mxu0 0.0
    %835 = vmatprep.subr.mxu0 0.0
    %836 = vmatpush2.msra.mxu0 0.0
    %837 = vmatprep.subr.mxu0 0.0
    %838 = vmatpush2.msra.mxu0 0.0
    %839 = vmatprep.subr.mxu0 0.0
    %840 = vmatpush2.msra.mxu0 0.0
    %841 = vmatprep.subr.mxu0 0.0
    %842 = vmatpush2.msra.mxu0 0.0
    %843 = vmatprep.subr.mxu0 0.0
    %844 = vmatpush2.msra.mxu0 0.0
    %845 = vmatprep.subr.mxu0 0.0
    %846 = vmatpush2.msra.mxu0 0.0
    %847 = vmatprep.subr.mxu0 0.0
    %848 = vmatpush2.msra.mxu0 0.0
    %849 = vmatprep.subr.mxu0 0.0
    %850 = vmatpush2.msra.mxu0 0.0
    %851 = vmatprep.subr.mxu0 0.0
    %852 = vmatpush2.msra.mxu0 0.0
    %853 = vmatprep.subr.mxu0 0.0
    %854 = vmatpush2.msra.mxu0 0.0
    %855 = vmatprep.subr.mxu0 0.0
    %856 = vmatpush2.msra.mxu0 0.0
    %857 = vmatprep.mubr.f32.mxu0 0.0
    %858 = vmatmul.mubr.f32.gmra.mxu0 %v788
    %v859 = vpop.f32.mrf.mxu0
    %v860 = vadd.f32 0.0, %v859
    %v861 = vpop.f32.mrf.mxu0
    %862 = vmatprep.mubr.f32.mxu0 0.0
    %863 = vmatmul.mubr.f32.gmra.mxu0 %v791
    %v864 = vpop.f32.mrf.mxu0
    %v865 = vadd.f32 0.0, %v864
    %v866 = vpop.f32.mrf.mxu0
    %867 = vdwg.mxu0
    %v869 = vsel %vm347, %v511, 0
    %v872 = vsel %vm347, %v516, 0
    %874 = vmatprep.subr.mxu0 0.0
    %875 = vmatpush1.msra.mxu0 0.0
    %876 = vmatprep.subr.mxu0 0.0
    %877 = vmatpush1.msra.mxu0 0.0
    %878 = vmatprep.subr.mxu0 0.0
    %879 = vmatpush1.msra.mxu0 0.0
    %880 = vmatprep.subr.mxu0 0.0
    %881 = vmatpush1.msra.mxu0 0.0
    %882 = vmatprep.subr.mxu0 0.0
    %883 = vmatpush1.msra.mxu0 0.0
    %884 = vmatprep.subr.mxu0 0.0
    %885 = vmatpush1.msra.mxu0 0.0
    %886 = vmatprep.subr.mxu0 0.0
    %887 = vmatpush1.msra.mxu0 0.0
    %888 = vmatprep.subr.mxu0 0.0
    %889 = vmatpush1.msra.mxu0 0.0
    %890 = vmatprep.subr.mxu0 0.0
    %891 = vmatpush1.msra.mxu0 0.0
    %892 = vmatprep.subr.mxu0 0.0
    %893 = vmatpush1.msra.mxu0 0.0
    %894 = vmatprep.subr.mxu0 0.0
    %895 = vmatpush1.msra.mxu0 0.0
    %896 = vmatprep.subr.mxu0 0.0
    %897 = vmatpush1.msra.mxu0 0.0
    %898 = vmatprep.subr.mxu0 0.0
    %899 = vmatpush1.msra.mxu0 0.0
    %900 = vmatprep.subr.mxu0 0.0
    %901 = vmatpush1.msra.mxu0 0.0
    %902 = vmatprep.subr.mxu0 0.0
    %903 = vmatpush1.msra.mxu0 %v313
    %904 = vmatprep.subr.mxu0 0.0
    %905 = vmatpush1.msra.mxu0 %v312
    %906 = vmatprep.subr.mxu0 0.0
    %907 = vmatpush2.msra.mxu0 0.0
    %908 = vmatprep.subr.mxu0 0.0
    %909 = vmatpush2.msra.mxu0 0.0
    %910 = vmatprep.subr.mxu0 0.0
    %911 = vmatpush2.msra.mxu0 0.0
    %912 = vmatprep.subr.mxu0 0.0
    %913 = vmatpush2.msra.mxu0 0.0
    %914 = vmatprep.subr.mxu0 0.0
    %915 = vmatpush2.msra.mxu0 0.0
    %916 = vmatprep.subr.mxu0 0.0
    %917 = vmatpush2.msra.mxu0 0.0
    %918 = vmatprep.subr.mxu0 0.0
    %919 = vmatpush2.msra.mxu0 0.0
    %920 = vmatprep.subr.mxu0 0.0
    %921 = vmatpush2.msra.mxu0 0.0
    %922 = vmatprep.subr.mxu0 0.0
    %923 = vmatpush2.msra.mxu0 0.0
    %924 = vmatprep.subr.mxu0 0.0
    %925 = vmatpush2.msra.mxu0 0.0
    %926 = vmatprep.subr.mxu0 0.0
    %927 = vmatpush2.msra.mxu0 0.0
    %928 = vmatprep.subr.mxu0 0.0
    %929 = vmatpush2.msra.mxu0 0.0
    %930 = vmatprep.subr.mxu0 0.0
    %931 = vmatpush2.msra.mxu0 0.0
    %932 = vmatprep.subr.mxu0 0.0
    %933 = vmatpush2.msra.mxu0 0.0
    %934 = vmatprep.subr.mxu0 0.0
    %935 = vmatpush2.msra.mxu0 0.0
    %936 = vmatprep.subr.mxu0 0.0
    %937 = vmatpush2.msra.mxu0 0.0
    %938 = vmatprep.mubr.f32.mxu0 0.0
    %939 = vmatmul.mubr.f32.gmra.mxu0 %v869
    %v940 = vpop.f32.mrf.mxu0
    %v941 = vadd.f32 %v860, %v940
    %v942 = vpop.f32.mrf.mxu0
    %943 = vmatprep.mubr.f32.mxu0 0.0
    %944 = vmatmul.mubr.f32.gmra.mxu0 %v872
    %v945 = vpop.f32.mrf.mxu0
    %v946 = vadd.f32 %v865, %v945
    %v947 = vpop.f32.mrf.mxu0
    %948 = vdwg.mxu0
    %v950 = vlaneseq
    %v951 = vshrl.u32 %v950, 7
    %v952 = vsub.s32 0, %v951
    %v953 = vrot.slane %v302, %v952
    %v955 = vadd.f32 %v941, %v953
    %v956 = vadd.f32 %v946, %v953
    %vm957 = vcmask 261120
    %v958 = vsel %vm957, %v955, 0.0
    %v959 = vsel %vm957, %v956, 0.0
    %v960 = vadd.f32 %v958, %v959
    %v961 = vrot.slane %v960, 4
    %v962 = vadd.f32 %v960, %v961
    %v963 = vrot.slane %v962, 2
    %v964 = vadd.f32 %v962, %v963
    %v965 = vrot.slane %v964, 1
    %v966 = vadd.f32 %v964, %v965
    %v967 = vrcp.pop 16.0
    %v968 = vmul.f32 %v966, %v967
    %v969 = vsub.f32 %v955, %v968
    %v970 = vsub.f32 %v956, %v968
    %v971 = vmul.f32 %v969, %v969
    %v972 = vmul.f32 %v970, %v970
    %v973 = vsel %vm957, %v971, 0.0
    %v974 = vsel %vm957, %v972, 0.0
    %v975 = vadd.f32 %v973, %v974
    %v976 = vrot.slane %v975, 4
    %v977 = vadd.f32 %v975, %v976
    %v978 = vrot.slane %v977, 2
    %v979 = vadd.f32 %v977, %v978
    %v980 = vrot.slane %v979, 1
    %v981 = vadd.f32 %v979, %v980
    %v982 = vmul.f32 %v981, %v967
    %v983 = vadd.f32 %v982, 1.0
    %v984 = vrsqrt.pop %v983
    %v985 = vmul.f32 %v969, %v984
    %v986 = vmul.f32 %v970, %v984
    %v988 = vlaneseq
    %v989 = vshrl.u32 %v988, 7
    %v990 = vsub.s32 0, %v989
    %v991 = vrot.slane %v306, %v990
    %v993 = vmul.f32 %v991, %v985
    %v994 = vmul.f32 %v991, %v986
    %v996 = vlaneseq
    %v997 = vshrl.u32 %v996, 7
    %v998 = vsub.s32 0, %v997
    %v999 = vrot.slane %v304, %v998
    %v1001 = vadd.f32 %v993, %v999
    %v1002 = vadd.f32 %v994, %v999
    %vm1003 = vcmp.ge.f32.partialorder %v1001, 0.0
    %vm1004 = vcmp.ge.f32.partialorder %v1002, 0.0
    %v1005 = vmul.f32 %v1001, 0.01
    %v1006 = vmul.f32 %v1002, 0.01
    %v1007 = vsel %vm1003, %v1001, %v1005
    %v1008 = vsel %vm1004, %v1002, %v1006
    %v1010 = vsel %vm347, %v344, 0
    %v1013 = vsel %vm347, %v345, 0
    %v1016 = vsel %vm347, %v346, 0
    %1018 = vmatprep.subr.mxu0 0.0
    %1019 = vmatpush1.msra.mxu0 0.0
    %1020 = vmatprep.subr.mxu0 0.0
    %1021 = vmatpush1.msra.mxu0 0.0
    %1022 = vmatprep.subr.mxu0 0.0
    %1023 = vmatpush1.msra.mxu0 0.0
    %1024 = vmatprep.subr.mxu0 0.0
    %1025 = vmatpush1.msra.mxu0 0.0
    %1026 = vmatprep.subr.mxu0 0.0
    %1027 = vmatpush1.msra.mxu0 0.0
    %1028 = vmatprep.subr.mxu0 0.0
    %1029 = vmatpush1.msra.mxu0 0.0
    %1030 = vmatprep.subr.mxu0 0.0
    %1031 = vmatpush1.msra.mxu0 0.0
    %1032 = vmatprep.subr.mxu0 0.0
    %1033 = vmatpush1.msra.mxu0 0.0
    %1034 = vmatprep.subr.mxu0 0.0
    %1035 = vmatpush1.msra.mxu0 0.0
    %1036 = vmatprep.subr.mxu0 0.0
    %1037 = vmatpush1.msra.mxu0 0.0
    %1038 = vmatprep.subr.mxu0 0.0
    %1039 = vmatpush1.msra.mxu0 0.0
    %1040 = vmatprep.subr.mxu0 0.0
    %1041 = vmatpush1.msra.mxu0 0.0
    %1042 = vmatprep.subr.mxu0 0.0
    %1043 = vmatpush1.msra.mxu0 0.0
    %1044 = vmatprep.subr.mxu0 0.0
    %1045 = vmatpush1.msra.mxu0 0.0
    %1046 = vmatprep.subr.mxu0 0.0
    %1047 = vmatpush1.msra.mxu0 %v310
    %1048 = vmatprep.subr.mxu0 0.0
    %1049 = vmatpush1.msra.mxu0 %v309
    %1050 = vmatprep.subr.mxu0 0.0
    %1051 = vmatpush2.msra.mxu0 0.0
    %1052 = vmatprep.subr.mxu0 0.0
    %1053 = vmatpush2.msra.mxu0 0.0
    %1054 = vmatprep.subr.mxu0 0.0
    %1055 = vmatpush2.msra.mxu0 0.0
    %1056 = vmatprep.subr.mxu0 0.0
    %1057 = vmatpush2.msra.mxu0 0.0
    %1058 = vmatprep.subr.mxu0 0.0
    %1059 = vmatpush2.msra.mxu0 0.0
    %1060 = vmatprep.subr.mxu0 0.0
    %1061 = vmatpush2.msra.mxu0 0.0
    %1062 = vmatprep.subr.mxu0 0.0
    %1063 = vmatpush2.msra.mxu0 0.0
    %1064 = vmatprep.subr.mxu0 0.0
    %1065 = vmatpush2.msra.mxu0 0.0
    %1066 = vmatprep.subr.mxu0 0.0
    %1067 = vmatpush2.msra.mxu0 0.0
    %1068 = vmatprep.subr.mxu0 0.0
    %1069 = vmatpush2.msra.mxu0 0.0
    %1070 = vmatprep.subr.mxu0 0.0
    %1071 = vmatpush2.msra.mxu0 0.0
    %1072 = vmatprep.subr.mxu0 0.0
    %1073 = vmatpush2.msra.mxu0 0.0
    %1074 = vmatprep.subr.mxu0 0.0
    %1075 = vmatpush2.msra.mxu0 0.0
    %1076 = vmatprep.subr.mxu0 0.0
    %1077 = vmatpush2.msra.mxu0 0.0
    %1078 = vmatprep.subr.mxu0 0.0
    %1079 = vmatpush2.msra.mxu0 0.0
    %1080 = vmatprep.subr.mxu0 0.0
    %1081 = vmatpush2.msra.mxu0 0.0
    %1082 = vmatprep.mubr.f32.mxu0 0.0
    %1083 = vmatmul.mubr.f32.gmra.mxu0 %v1010
    %v1084 = vpop.f32.mrf.mxu0
    %v1085 = vadd.f32 0.0, %v1084
    %v1086 = vpop.f32.mrf.mxu0
    %1087 = vmatprep.mubr.f32.mxu0 0.0
    %1088 = vmatmul.mubr.f32.gmra.mxu0 %v1013
    %v1089 = vpop.f32.mrf.mxu0
    %v1090 = vadd.f32 0.0, %v1089
    %v1091 = vpop.f32.mrf.mxu0
    %1092 = vmatprep.mubr.f32.mxu0 0.0
    %1093 = vmatmul.mubr.f32.gmra.mxu0 %v1016
    %v1094 = vpop.f32.mrf.mxu0
    %v1095 = vadd.f32 0.0, %v1094
    %v1096 = vpop.f32.mrf.mxu0
    %1097 = vdwg.mxu0
    %v1098 = vadd.f32 %v774, %v1085
    %v1099 = vadd.f32 %v779, %v1090
    %v1100 = vadd.f32 %v784, %v1095
    %v1102 = vlaneseq
    %v1103 = vshrl.u32 %v1102, 7
    %v1104 = vsub.s32 0, %v1103
    %v1105 = vrot.slane %v303, %v1104
    %v1107 = vadd.f32 %v1098, %v1105
    %v1108 = vadd.f32 %v1099, %v1105
    %v1109 = vadd.f32 %v1100, %v1105
    %v1110 = vsel %vm957, %v1107, 0.0
    %v1111 = vsel %vm957, %v1108, 0.0
    %v1112 = vadd.f32 %v1110, %v1111
    %v1113 = vsel %vm957, %v1109, 0.0
    %v1114 = vadd.f32 %v1112, %v1113
    %v1115 = vrot.slane %v1114, 4
    %v1116 = vadd.f32 %v1114, %v1115
    %v1117 = vrot.slane %v1116, 2
    %v1118 = vadd.f32 %v1116, %v1117
    %v1119 = vrot.slane %v1118, 1
    %v1120 = vadd.f32 %v1118, %v1119
    %v1121 = vrcp.pop 24.0
    %v1122 = vmul.f32 %v1120, %v1121
    %v1123 = vsub.f32 %v1107, %v1122
    %v1124 = vsub.f32 %v1108, %v1122
    %v1125 = vsub.f32 %v1109, %v1122
    %v1126 = vmul.f32 %v1123, %v1123
    %v1127 = vmul.f32 %v1124, %v1124
    %v1128 = vmul.f32 %v1125, %v1125
    %v1129 = vsel %vm957, %v1126, 0.0
    %v1130 = vsel %vm957, %v1127, 0.0
    %v1131 = vadd.f32 %v1129, %v1130
    %v1132 = vsel %vm957, %v1128, 0.0
    %v1133 = vadd.f32 %v1131, %v1132
    %v1134 = vrot.slane %v1133, 4
    %v1135 = vadd.f32 %v1133, %v1134
    %v1136 = vrot.slane %v1135, 2
    %v1137 = vadd.f32 %v1135, %v1136
    %v1138 = vrot.slane %v1137, 1
    %v1139 = vadd.f32 %v1137, %v1138
    %v1140 = vmul.f32 %v1139, %v1121
    %v1141 = vadd.f32 %v1140, 1.0
    %v1142 = vrsqrt.pop %v1141
    %v1143 = vmul.f32 %v1123, %v1142
    %v1144 = vmul.f32 %v1124, %v1142
    %v1145 = vmul.f32 %v1125, %v1142
    %v1147 = vlaneseq
    %v1148 = vshrl.u32 %v1147, 7
    %v1149 = vsub.s32 0, %v1148
    %v1150 = vrot.slane %v307, %v1149
    %v1152 = vmul.f32 %v1150, %v1143
    %v1153 = vmul.f32 %v1150, %v1144
    %v1154 = vmul.f32 %v1150, %v1145
    %v1156 = vlaneseq
    %v1157 = vshrl.u32 %v1156, 7
    %v1158 = vsub.s32 0, %v1157
    %v1159 = vrot.slane %v305, %v1158
    %v1161 = vadd.f32 %v1152, %v1159
    %v1162 = vadd.f32 %v1153, %v1159
    %v1163 = vadd.f32 %v1154, %v1159
    %vm1164 = vcmp.ge.f32.partialorder %v1161, 0.0
    %vm1165 = vcmp.ge.f32.partialorder %v1162, 0.0
    %vm1166 = vcmp.ge.f32.partialorder %v1163, 0.0
    %v1167 = vmul.f32 %v1161, 0.01
    %v1168 = vmul.f32 %v1162, 0.01
    %v1169 = vmul.f32 %v1163, 0.01
    %v1170 = vsel %vm1164, %v1161, %v1167
    %v1171 = vsel %vm1165, %v1162, %v1168
    %v1172 = vsel %vm1166, %v1163, %v1169
    %1173 = vmatprep.subr.mxu0 0.0
    %1174 = vmatpush1.msra.mxu0 0.0
    %1175 = vmatprep.subr.mxu0 0.0
    %1176 = vmatpush1.msra.mxu0 0.0
    %1177 = vmatprep.subr.mxu0 0.0
    %1178 = vmatpush1.msra.mxu0 0.0
    %1179 = vmatprep.subr.mxu0 0.0
    %1180 = vmatpush1.msra.mxu0 0.0
    %1181 = vmatprep.subr.mxu0 0.0
    %1182 = vmatpush1.msra.mxu0 0.0
    %1183 = vmatprep.subr.mxu0 0.0
    %1184 = vmatpush1.msra.mxu0 0.0
    %1185 = vmatprep.subr.mxu0 0.0
    %1186 = vmatpush1.msra.mxu0 0.0
    %1187 = vmatprep.subr.mxu0 0.0
    %1188 = vmatpush1.msra.mxu0 0.0
    %1189 = vmatprep.subr.mxu0 0.0
    %1190 = vmatpush1.msra.mxu0 0.0
    %1191 = vmatprep.subr.mxu0 0.0
    %1192 = vmatpush1.msra.mxu0 0.0
    %1193 = vmatprep.subr.mxu0 0.0
    %1194 = vmatpush1.msra.mxu0 0.0
    %1195 = vmatprep.subr.mxu0 0.0
    %1196 = vmatpush1.msra.mxu0 0.0
    %1197 = vmatprep.subr.mxu0 0.0
    %1198 = vmatpush1.msra.mxu0 0.0
    %1199 = vmatprep.subr.mxu0 0.0
    %1200 = vmatpush1.msra.mxu0 0.0
    %1201 = vmatprep.subr.mxu0 0.0
    %1202 = vmatpush1.msra.mxu0 %v1008
    %1203 = vmatprep.subr.mxu0 0.0
    %1204 = vmatpush1.msra.mxu0 %v1007
    %1205 = vmatprep.subr.mxu0 0.0
    %1206 = vmatpush2.msra.mxu0 0.0
    %1207 = vmatprep.subr.mxu0 0.0
    %1208 = vmatpush2.msra.mxu0 0.0
    %1209 = vmatprep.subr.mxu0 0.0
    %1210 = vmatpush2.msra.mxu0 0.0
    %1211 = vmatprep.subr.mxu0 0.0
    %1212 = vmatpush2.msra.mxu0 0.0
    %1213 = vmatprep.subr.mxu0 0.0
    %1214 = vmatpush2.msra.mxu0 0.0
    %1215 = vmatprep.subr.mxu0 0.0
    %1216 = vmatpush2.msra.mxu0 0.0
    %1217 = vmatprep.subr.mxu0 0.0
    %1218 = vmatpush2.msra.mxu0 0.0
    %1219 = vmatprep.subr.mxu0 0.0
    %1220 = vmatpush2.msra.mxu0 0.0
    %1221 = vmatprep.subr.mxu0 0.0
    %1222 = vmatpush2.msra.mxu0 0.0
    %1223 = vmatprep.subr.mxu0 0.0
    %1224 = vmatpush2.msra.mxu0 0.0
    %1225 = vmatprep.subr.mxu0 0.0
    %1226 = vmatpush2.msra.mxu0 0.0
    %1227 = vmatprep.subr.mxu0 0.0
    %1228 = vmatpush2.msra.mxu0 0.0
    %1229 = vmatprep.subr.mxu0 0.0
    %1230 = vmatpush2.msra.mxu0 0.0
    %1231 = vmatprep.subr.mxu0 0.0
    %1232 = vmatpush2.msra.mxu0 0.0
    %1233 = vmatprep.subr.mxu0 0.0
    %1234 = vmatpush2.msra.mxu0 0.0
    %1235 = vmatprep.subr.mxu0 0.0
    %1236 = vmatpush2.msra.mxu0 0.0
    %1237 = vmatprep.mubr.f32.mxu0 0.0
    %1238 = vmatmul.mubr.f32.gmra.mxu0 %v349
    %v1239 = vpop.f32.mrf.mxu0
    %v1240 = vadd.f32 0.0, %v1239
    %v1241 = vpop.f32.mrf.mxu0
    %1242 = vmatprep.mubr.f32.mxu0 0.0
    %1243 = vmatmul.mubr.f32.gmra.mxu0 %v352
    %v1244 = vpop.f32.mrf.mxu0
    %v1245 = vadd.f32 0.0, %v1244
    %v1246 = vpop.f32.mrf.mxu0
    %1247 = vmatprep.mubr.f32.mxu0 0.0
    %1248 = vmatmul.mubr.f32.gmra.mxu0 %v355
    %v1249 = vpop.f32.mrf.mxu0
    %v1250 = vadd.f32 0.0, %v1249
    %v1251 = vpop.f32.mrf.mxu0
    %1252 = vdwg.mxu0
    %1253 = vmatprep.subr.mxu0 0.0
    %1254 = vmatpush1.msra.mxu0 0.0
    %1255 = vmatprep.subr.mxu0 0.0
    %1256 = vmatpush1.msra.mxu0 0.0
    %1257 = vmatprep.subr.mxu0 0.0
    %1258 = vmatpush1.msra.mxu0 0.0
    %1259 = vmatprep.subr.mxu0 0.0
    %1260 = vmatpush1.msra.mxu0 0.0
    %1261 = vmatprep.subr.mxu0 0.0
    %1262 = vmatpush1.msra.mxu0 0.0
    %1263 = vmatprep.subr.mxu0 0.0
    %1264 = vmatpush1.msra.mxu0 0.0
    %1265 = vmatprep.subr.mxu0 0.0
    %1266 = vmatpush1.msra.mxu0 0.0
    %1267 = vmatprep.subr.mxu0 0.0
    %1268 = vmatpush1.msra.mxu0 0.0
    %1269 = vmatprep.subr.mxu0 0.0
    %1270 = vmatpush1.msra.mxu0 0.0
    %1271 = vmatprep.subr.mxu0 0.0
    %1272 = vmatpush1.msra.mxu0 0.0
    %1273 = vmatprep.subr.mxu0 0.0
    %1274 = vmatpush1.msra.mxu0 0.0
    %1275 = vmatprep.subr.mxu0 0.0
    %1276 = vmatpush1.msra.mxu0 0.0
    %1277 = vmatprep.subr.mxu0 0.0
    %1278 = vmatpush1.msra.mxu0 0.0
    %1279 = vmatprep.subr.mxu0 0.0
    %1280 = vmatpush1.msra.mxu0 %v1172
    %1281 = vmatprep.subr.mxu0 0.0
    %1282 = vmatpush1.msra.mxu0 %v1171
    %1283 = vmatprep.subr.mxu0 0.0
    %1284 = vmatpush1.msra.mxu0 %v1170
    %1285 = vmatprep.subr.mxu0 0.0
    %1286 = vmatpush2.msra.mxu0 0.0
    %1287 = vmatprep.subr.mxu0 0.0
    %1288 = vmatpush2.msra.mxu0 0.0
    %1289 = vmatprep.subr.mxu0 0.0
    %1290 = vmatpush2.msra.mxu0 0.0
    %1291 = vmatprep.subr.mxu0 0.0
    %1292 = vmatpush2.msra.mxu0 0.0
    %1293 = vmatprep.subr.mxu0 0.0
    %1294 = vmatpush2.msra.mxu0 0.0
    %1295 = vmatprep.subr.mxu0 0.0
    %1296 = vmatpush2.msra.mxu0 0.0
    %1297 = vmatprep.subr.mxu0 0.0
    %1298 = vmatpush2.msra.mxu0 0.0
    %1299 = vmatprep.subr.mxu0 0.0
    %1300 = vmatpush2.msra.mxu0 0.0
    %1301 = vmatprep.subr.mxu0 0.0
    %1302 = vmatpush2.msra.mxu0 0.0
    %1303 = vmatprep.subr.mxu0 0.0
    %1304 = vmatpush2.msra.mxu0 0.0
    %1305 = vmatprep.subr.mxu0 0.0
    %1306 = vmatpush2.msra.mxu0 0.0
    %1307 = vmatprep.subr.mxu0 0.0
    %1308 = vmatpush2.msra.mxu0 0.0
    %1309 = vmatprep.subr.mxu0 0.0
    %1310 = vmatpush2.msra.mxu0 0.0
    %1311 = vmatprep.subr.mxu0 0.0
    %1312 = vmatpush2.msra.mxu0 0.0
    %1313 = vmatprep.subr.mxu0 0.0
    %1314 = vmatpush2.msra.mxu0 0.0
    %1315 = vmatprep.subr.mxu0 0.0
    %1316 = vmatpush2.msra.mxu0 0.0
    %1317 = vmatprep.mubr.f32.mxu0 0.0
    %1318 = vmatmul.mubr.f32.gmra.mxu0 %v439
    %v1319 = vpop.f32.mrf.mxu0
    %v1320 = vadd.f32 0.0, %v1319
    %v1321 = vpop.f32.mrf.mxu0
    %1322 = vmatprep.mubr.f32.mxu0 0.0
    %1323 = vmatmul.mubr.f32.gmra.mxu0 %v442
    %v1324 = vpop.f32.mrf.mxu0
    %v1325 = vadd.f32 0.0, %v1324
    %v1326 = vpop.f32.mrf.mxu0
    %1327 = vdwg.mxu0
    %1328 = vmatprep.subr.mxu0 0.0
    %1329 = vmatpush1.msra.mxu0 0.0
    %1330 = vmatprep.subr.mxu0 0.0
    %1331 = vmatpush1.msra.mxu0 0.0
    %1332 = vmatprep.subr.mxu0 0.0
    %1333 = vmatpush1.msra.mxu0 0.0
    %1334 = vmatprep.subr.mxu0 0.0
    %1335 = vmatpush1.msra.mxu0 0.0
    %1336 = vmatprep.subr.mxu0 0.0
    %1337 = vmatpush1.msra.mxu0 0.0
    %1338 = vmatprep.subr.mxu0 0.0
    %1339 = vmatpush1.msra.mxu0 0.0
    %1340 = vmatprep.subr.mxu0 0.0
    %1341 = vmatpush1.msra.mxu0 0.0
    %1342 = vmatprep.subr.mxu0 0.0
    %1343 = vmatpush1.msra.mxu0 0.0
    %1344 = vmatprep.subr.mxu0 0.0
    %1345 = vmatpush1.msra.mxu0 0.0
    %1346 = vmatprep.subr.mxu0 0.0
    %1347 = vmatpush1.msra.mxu0 0.0
    %1348 = vmatprep.subr.mxu0 0.0
    %1349 = vmatpush1.msra.mxu0 0.0
    %1350 = vmatprep.subr.mxu0 0.0
    %1351 = vmatpush1.msra.mxu0 0.0
    %1352 = vmatprep.subr.mxu0 0.0
    %1353 = vmatpush1.msra.mxu0 0.0
    %1354 = vmatprep.subr.mxu0 0.0
    %1355 = vmatpush1.msra.mxu0 %v1172
    %1356 = vmatprep.subr.mxu0 0.0
    %1357 = vmatpush1.msra.mxu0 %v1171
    %1358 = vmatprep.subr.mxu0 0.0
    %1359 = vmatpush1.msra.mxu0 %v1170
    %1360 = vmatprep.subr.mxu0 0.0
    %1361 = vmatpush2.msra.mxu0 0.0
    %1362 = vmatprep.subr.mxu0 0.0
    %1363 = vmatpush2.msra.mxu0 0.0
    %1364 = vmatprep.subr.mxu0 0.0
    %1365 = vmatpush2.msra.mxu0 0.0
    %1366 = vmatprep.subr.mxu0 0.0
    %1367 = vmatpush2.msra.mxu0 0.0
    %1368 = vmatprep.subr.mxu0 0.0
    %1369 = vmatpush2.msra.mxu0 0.0
    %1370 = vmatprep.subr.mxu0 0.0
    %1371 = vmatpush2.msra.mxu0 0.0
    %1372 = vmatprep.subr.mxu0 0.0
    %1373 = vmatpush2.msra.mxu0 0.0
    %1374 = vmatprep.subr.mxu0 0.0
    %1375 = vmatpush2.msra.mxu0 0.0
    %1376 = vmatprep.subr.mxu0 0.0
    %1377 = vmatpush2.msra.mxu0 0.0
    %1378 = vmatprep.subr.mxu0 0.0
    %1379 = vmatpush2.msra.mxu0 0.0
    %1380 = vmatprep.subr.mxu0 0.0
    %1381 = vmatpush2.msra.mxu0 0.0
    %1382 = vmatprep.subr.mxu0 0.0
    %1383 = vmatpush2.msra.mxu0 0.0
    %1384 = vmatprep.subr.mxu0 0.0
    %1385 = vmatpush2.msra.mxu0 0.0
    %1386 = vmatprep.subr.mxu0 0.0
    %1387 = vmatpush2.msra.mxu0 0.0
    %1388 = vmatprep.subr.mxu0 0.0
    %1389 = vmatpush2.msra.mxu0 0.0
    %1390 = vmatprep.subr.mxu0 0.0
    %1391 = vmatpush2.msra.mxu0 0.0
    %1392 = vmatprep.mubr.f32.mxu0 0.0
    %1393 = vmatmul.mubr.f32.gmra.mxu0 %v520
    %v1394 = vpop.f32.mrf.mxu0
    %v1395 = vadd.f32 0.0, %v1394
    %v1396 = vpop.f32.mrf.mxu0
    %1397 = vmatprep.mubr.f32.mxu0 0.0
    %1398 = vmatmul.mubr.f32.gmra.mxu0 %v523
    %v1399 = vpop.f32.mrf.mxu0
    %v1400 = vadd.f32 0.0, %v1399
    %v1401 = vpop.f32.mrf.mxu0
    %1402 = vmatprep.mubr.f32.mxu0 0.0
    %1403 = vmatmul.mubr.f32.gmra.mxu0 %v526
    %v1404 = vpop.f32.mrf.mxu0
    %v1405 = vadd.f32 0.0, %v1404
    %v1406 = vpop.f32.mrf.mxu0
    %1407 = vdwg.mxu0
    %v1409 = vsel %vm957, %v1395, 0
    %v1412 = vsel %vm957, %v1400, 0
    %v1415 = vsel %vm957, %v1405, 0
    %1417 = vmatprep.subr.mxu0 0.0
    %1418 = vmatpush1.msra.mxu0 0.0
    %1419 = vmatprep.subr.mxu0 0.0
    %1420 = vmatpush1.msra.mxu0 0.0
    %1421 = vmatprep.subr.mxu0 0.0
    %1422 = vmatpush1.msra.mxu0 0.0
    %1423 = vmatprep.subr.mxu0 0.0
    %1424 = vmatpush1.msra.mxu0 0.0
    %1425 = vmatprep.subr.mxu0 0.0
    %1426 = vmatpush1.msra.mxu0 0.0
    %1427 = vmatprep.subr.mxu0 0.0
    %1428 = vmatpush1.msra.mxu0 0.0
    %1429 = vmatprep.subr.mxu0 0.0
    %1430 = vmatpush1.msra.mxu0 0.0
    %1431 = vmatprep.subr.mxu0 0.0
    %1432 = vmatpush1.msra.mxu0 0.0
    %1433 = vmatprep.subr.mxu0 0.0
    %1434 = vmatpush1.msra.mxu0 0.0
    %1435 = vmatprep.subr.mxu0 0.0
    %1436 = vmatpush1.msra.mxu0 0.0
    %1437 = vmatprep.subr.mxu0 0.0
    %1438 = vmatpush1.msra.mxu0 0.0
    %1439 = vmatprep.subr.mxu0 0.0
    %1440 = vmatpush1.msra.mxu0 0.0
    %1441 = vmatprep.subr.mxu0 0.0
    %1442 = vmatpush1.msra.mxu0 %v341
    %1443 = vmatprep.subr.mxu0 0.0
    %1444 = vmatpush1.msra.mxu0 %v340
    %1445 = vmatprep.subr.mxu0 0.0
    %1446 = vmatpush1.msra.mxu0 %v339
    %1447 = vmatprep.subr.mxu0 0.0
    %1448 = vmatpush1.msra.mxu0 %v338
    %1449 = vmatprep.subr.mxu0 0.0
    %1450 = vmatpush2.msra.mxu0 0.0
    %1451 = vmatprep.subr.mxu0 0.0
    %1452 = vmatpush2.msra.mxu0 0.0
    %1453 = vmatprep.subr.mxu0 0.0
    %1454 = vmatpush2.msra.mxu0 0.0
    %1455 = vmatprep.subr.mxu0 0.0
    %1456 = vmatpush2.msra.mxu0 0.0
    %1457 = vmatprep.subr.mxu0 0.0
    %1458 = vmatpush2.msra.mxu0 0.0
    %1459 = vmatprep.subr.mxu0 0.0
    %1460 = vmatpush2.msra.mxu0 0.0
    %1461 = vmatprep.subr.mxu0 0.0
    %1462 = vmatpush2.msra.mxu0 0.0
    %1463 = vmatprep.subr.mxu0 0.0
    %1464 = vmatpush2.msra.mxu0 0.0
    %1465 = vmatprep.subr.mxu0 0.0
    %1466 = vmatpush2.msra.mxu0 0.0
    %1467 = vmatprep.subr.mxu0 0.0
    %1468 = vmatpush2.msra.mxu0 0.0
    %1469 = vmatprep.subr.mxu0 0.0
    %1470 = vmatpush2.msra.mxu0 0.0
    %1471 = vmatprep.subr.mxu0 0.0
    %1472 = vmatpush2.msra.mxu0 0.0
    %1473 = vmatprep.subr.mxu0 0.0
    %1474 = vmatpush2.msra.mxu0 0.0
    %1475 = vmatprep.subr.mxu0 0.0
    %1476 = vmatpush2.msra.mxu0 0.0
    %1477 = vmatprep.subr.mxu0 0.0
    %1478 = vmatpush2.msra.mxu0 0.0
    %1479 = vmatprep.subr.mxu0 0.0
    %1480 = vmatpush2.msra.mxu0 0.0
    %1481 = vmatprep.mubr.f32.mxu0 0.0
    %1482 = vmatmul.mubr.f32.gmra.mxu0 %v1409
    %v1483 = vpop.f32.mrf.mxu0
    %v1484 = vadd.f32 0.0, %v1483
    %v1485 = vpop.f32.mrf.mxu0
    %1486 = vmatprep.mubr.f32.mxu0 0.0
    %1487 = vmatmul.mubr.f32.gmra.mxu0 %v1412
    %v1488 = vpop.f32.mrf.mxu0
    %v1489 = vadd.f32 0.0, %v1488
    %v1490 = vpop.f32.mrf.mxu0
    %1491 = vmatprep.mubr.f32.mxu0 0.0
    %1492 = vmatmul.mubr.f32.gmra.mxu0 %v1415
    %v1493 = vpop.f32.mrf.mxu0
    %v1494 = vadd.f32 0.0, %v1493
    %v1495 = vpop.f32.mrf.mxu0
    %1496 = vdwg.mxu0
    %v1498 = vsel %vm957, %v1240, 0
    %v1501 = vsel %vm957, %v1245, 0
    %v1504 = vsel %vm957, %v1250, 0
    %1506 = vmatprep.subr.mxu0 0.0
    %1507 = vmatpush1.msra.mxu0 0.0
    %1508 = vmatprep.subr.mxu0 0.0
    %1509 = vmatpush1.msra.mxu0 0.0
    %1510 = vmatprep.subr.mxu0 0.0
    %1511 = vmatpush1.msra.mxu0 0.0
    %1512 = vmatprep.subr.mxu0 0.0
    %1513 = vmatpush1.msra.mxu0 0.0
    %1514 = vmatprep.subr.mxu0 0.0
    %1515 = vmatpush1.msra.mxu0 0.0
    %1516 = vmatprep.subr.mxu0 0.0
    %1517 = vmatpush1.msra.mxu0 0.0
    %1518 = vmatprep.subr.mxu0 0.0
    %1519 = vmatpush1.msra.mxu0 0.0
    %1520 = vmatprep.subr.mxu0 0.0
    %1521 = vmatpush1.msra.mxu0 0.0
    %1522 = vmatprep.subr.mxu0 0.0
    %1523 = vmatpush1.msra.mxu0 0.0
    %1524 = vmatprep.subr.mxu0 0.0
    %1525 = vmatpush1.msra.mxu0 0.0
    %1526 = vmatprep.subr.mxu0 0.0
    %1527 = vmatpush1.msra.mxu0 0.0
    %1528 = vmatprep.subr.mxu0 0.0
    %1529 = vmatpush1.msra.mxu0 0.0
    %1530 = vmatprep.subr.mxu0 0.0
    %1531 = vmatpush1.msra.mxu0 %v333
    %1532 = vmatprep.subr.mxu0 0.0
    %1533 = vmatpush1.msra.mxu0 %v332
    %1534 = vmatprep.subr.mxu0 0.0
    %1535 = vmatpush1.msra.mxu0 %v331
    %1536 = vmatprep.subr.mxu0 0.0
    %1537 = vmatpush1.msra.mxu0 %v330
    %1538 = vmatprep.subr.mxu0 0.0
    %1539 = vmatpush2.msra.mxu0 0.0
    %1540 = vmatprep.subr.mxu0 0.0
    %1541 = vmatpush2.msra.mxu0 0.0
    %1542 = vmatprep.subr.mxu0 0.0
    %1543 = vmatpush2.msra.mxu0 0.0
    %1544 = vmatprep.subr.mxu0 0.0
    %1545 = vmatpush2.msra.mxu0 0.0
    %1546 = vmatprep.subr.mxu0 0.0
    %1547 = vmatpush2.msra.mxu0 0.0
    %1548 = vmatprep.subr.mxu0 0.0
    %1549 = vmatpush2.msra.mxu0 0.0
    %1550 = vmatprep.subr.mxu0 0.0
    %1551 = vmatpush2.msra.mxu0 0.0
    %1552 = vmatprep.subr.mxu0 0.0
    %1553 = vmatpush2.msra.mxu0 0.0
    %1554 = vmatprep.subr.mxu0 0.0
    %1555 = vmatpush2.msra.mxu0 0.0
    %1556 = vmatprep.subr.mxu0 0.0
    %1557 = vmatpush2.msra.mxu0 0.0
    %1558 = vmatprep.subr.mxu0 0.0
    %1559 = vmatpush2.msra.mxu0 0.0
    %1560 = vmatprep.subr.mxu0 0.0
    %1561 = vmatpush2.msra.mxu0 0.0
    %1562 = vmatprep.subr.mxu0 0.0
    %1563 = vmatpush2.msra.mxu0 0.0
    %1564 = vmatprep.subr.mxu0 0.0
    %1565 = vmatpush2.msra.mxu0 0.0
    %1566 = vmatprep.subr.mxu0 0.0
    %1567 = vmatpush2.msra.mxu0 0.0
    %1568 = vmatprep.subr.mxu0 0.0
    %1569 = vmatpush2.msra.mxu0 0.0
    %1570 = vmatprep.mubr.f32.mxu0 0.0
    %1571 = vmatmul.mubr.f32.gmra.mxu0 %v1498
    %v1572 = vpop.f32.mrf.mxu0
    %v1573 = vadd.f32 %v1484, %v1572
    %v1574 = vpop.f32.mrf.mxu0
    %1575 = vmatprep.mubr.f32.mxu0 0.0
    %1576 = vmatmul.mubr.f32.gmra.mxu0 %v1501
    %v1577 = vpop.f32.mrf.mxu0
    %v1578 = vadd.f32 %v1489, %v1577
    %v1579 = vpop.f32.mrf.mxu0
    %1580 = vmatprep.mubr.f32.mxu0 0.0
    %1581 = vmatmul.mubr.f32.gmra.mxu0 %v1504
    %v1582 = vpop.f32.mrf.mxu0
    %v1583 = vadd.f32 %v1494, %v1582
    %v1584 = vpop.f32.mrf.mxu0
    %1585 = vdwg.mxu0
    %v1587 = vsel %vm957, %v1007, 0
    %v1590 = vsel %vm957, %v1008, 0
    %1592 = vmatprep.subr.mxu0 0.0
    %1593 = vmatpush1.msra.mxu0 0.0
    %1594 = vmatprep.subr.mxu0 0.0
    %1595 = vmatpush1.msra.mxu0 0.0
    %1596 = vmatprep.subr.mxu0 0.0
    %1597 = vmatpush1.msra.mxu0 0.0
    %1598 = vmatprep.subr.mxu0 0.0
    %1599 = vmatpush1.msra.mxu0 0.0
    %1600 = vmatprep.subr.mxu0 0.0
    %1601 = vmatpush1.msra.mxu0 0.0
    %1602 = vmatprep.subr.mxu0 0.0
    %1603 = vmatpush1.msra.mxu0 0.0
    %1604 = vmatprep.subr.mxu0 0.0
    %1605 = vmatpush1.msra.mxu0 0.0
    %1606 = vmatprep.subr.mxu0 0.0
    %1607 = vmatpush1.msra.mxu0 0.0
    %1608 = vmatprep.subr.mxu0 0.0
    %1609 = vmatpush1.msra.mxu0 0.0
    %1610 = vmatprep.subr.mxu0 0.0
    %1611 = vmatpush1.msra.mxu0 0.0
    %1612 = vmatprep.subr.mxu0 0.0
    %1613 = vmatpush1.msra.mxu0 0.0
    %1614 = vmatprep.subr.mxu0 0.0
    %1615 = vmatpush1.msra.mxu0 0.0
    %1616 = vmatprep.subr.mxu0 0.0
    %1617 = vmatpush1.msra.mxu0 %v325
    %1618 = vmatprep.subr.mxu0 0.0
    %1619 = vmatpush1.msra.mxu0 %v324
    %1620 = vmatprep.subr.mxu0 0.0
    %1621 = vmatpush1.msra.mxu0 %v323
    %1622 = vmatprep.subr.mxu0 0.0
    %1623 = vmatpush1.msra.mxu0 %v322
    %1624 = vmatprep.subr.mxu0 0.0
    %1625 = vmatpush2.msra.mxu0 0.0
    %1626 = vmatprep.subr.mxu0 0.0
    %1627 = vmatpush2.msra.mxu0 0.0
    %1628 = vmatprep.subr.mxu0 0.0
    %1629 = vmatpush2.msra.mxu0 0.0
    %1630 = vmatprep.subr.mxu0 0.0
    %1631 = vmatpush2.msra.mxu0 0.0
    %1632 = vmatprep.subr.mxu0 0.0
    %1633 = vmatpush2.msra.mxu0 0.0
    %1634 = vmatprep.subr.mxu0 0.0
    %1635 = vmatpush2.msra.mxu0 0.0
    %1636 = vmatprep.subr.mxu0 0.0
    %1637 = vmatpush2.msra.mxu0 0.0
    %1638 = vmatprep.subr.mxu0 0.0
    %1639 = vmatpush2.msra.mxu0 0.0
    %1640 = vmatprep.subr.mxu0 0.0
    %1641 = vmatpush2.msra.mxu0 0.0
    %1642 = vmatprep.subr.mxu0 0.0
    %1643 = vmatpush2.msra.mxu0 0.0
    %1644 = vmatprep.subr.mxu0 0.0
    %1645 = vmatpush2.msra.mxu0 0.0
    %1646 = vmatprep.subr.mxu0 0.0
    %1647 = vmatpush2.msra.mxu0 0.0
    %1648 = vmatprep.subr.mxu0 0.0
    %1649 = vmatpush2.msra.mxu0 0.0
    %1650 = vmatprep.subr.mxu0 0.0
    %1651 = vmatpush2.msra.mxu0 0.0
    %1652 = vmatprep.subr.mxu0 0.0
    %1653 = vmatpush2.msra.mxu0 0.0
    %1654 = vmatprep.subr.mxu0 0.0
    %1655 = vmatpush2.msra.mxu0 0.0
    %1656 = vmatprep.mubr.f32.mxu0 0.0
    %1657 = vmatmul.mubr.f32.gmra.mxu0 %v1587
    %v1658 = vpop.f32.mrf.mxu0
    %v1659 = vadd.f32 0.0, %v1658
    %v1660 = vpop.f32.mrf.mxu0
    %1661 = vmatprep.mubr.f32.mxu0 0.0
    %1662 = vmatmul.mubr.f32.gmra.mxu0 %v1590
    %v1663 = vpop.f32.mrf.mxu0
    %v1664 = vadd.f32 0.0, %v1663
    %v1665 = vpop.f32.mrf.mxu0
    %1666 = vdwg.mxu0
    %v1668 = vsel %vm957, %v1320, 0
    %v1671 = vsel %vm957, %v1325, 0
    %1673 = vmatprep.subr.mxu0 0.0
    %1674 = vmatpush1.msra.mxu0 0.0
    %1675 = vmatprep.subr.mxu0 0.0
    %1676 = vmatpush1.msra.mxu0 0.0
    %1677 = vmatprep.subr.mxu0 0.0
    %1678 = vmatpush1.msra.mxu0 0.0
    %1679 = vmatprep.subr.mxu0 0.0
    %1680 = vmatpush1.msra.mxu0 0.0
    %1681 = vmatprep.subr.mxu0 0.0
    %1682 = vmatpush1.msra.mxu0 0.0
    %1683 = vmatprep.subr.mxu0 0.0
    %1684 = vmatpush1.msra.mxu0 0.0
    %1685 = vmatprep.subr.mxu0 0.0
    %1686 = vmatpush1.msra.mxu0 0.0
    %1687 = vmatprep.subr.mxu0 0.0
    %1688 = vmatpush1.msra.mxu0 0.0
    %1689 = vmatprep.subr.mxu0 0.0
    %1690 = vmatpush1.msra.mxu0 0.0
    %1691 = vmatprep.subr.mxu0 0.0
    %1692 = vmatpush1.msra.mxu0 0.0
    %1693 = vmatprep.subr.mxu0 0.0
    %1694 = vmatpush1.msra.mxu0 0.0
    %1695 = vmatprep.subr.mxu0 0.0
    %1696 = vmatpush1.msra.mxu0 0.0
    %1697 = vmatprep.subr.mxu0 0.0
    %1698 = vmatpush1.msra.mxu0 %v337
    %1699 = vmatprep.subr.mxu0 0.0
    %1700 = vmatpush1.msra.mxu0 %v336
    %1701 = vmatprep.subr.mxu0 0.0
    %1702 = vmatpush1.msra.mxu0 %v335
    %1703 = vmatprep.subr.mxu0 0.0
    %1704 = vmatpush1.msra.mxu0 %v334
    %1705 = vmatprep.subr.mxu0 0.0
    %1706 = vmatpush2.msra.mxu0 0.0
    %1707 = vmatprep.subr.mxu0 0.0
    %1708 = vmatpush2.msra.mxu0 0.0
    %1709 = vmatprep.subr.mxu0 0.0
    %1710 = vmatpush2.msra.mxu0 0.0
    %1711 = vmatprep.subr.mxu0 0.0
    %1712 = vmatpush2.msra.mxu0 0.0
    %1713 = vmatprep.subr.mxu0 0.0
    %1714 = vmatpush2.msra.mxu0 0.0
    %1715 = vmatprep.subr.mxu0 0.0
    %1716 = vmatpush2.msra.mxu0 0.0
    %1717 = vmatprep.subr.mxu0 0.0
    %1718 = vmatpush2.msra.mxu0 0.0
    %1719 = vmatprep.subr.mxu0 0.0
    %1720 = vmatpush2.msra.mxu0 0.0
    %1721 = vmatprep.subr.mxu0 0.0
    %1722 = vmatpush2.msra.mxu0 0.0
    %1723 = vmatprep.subr.mxu0 0.0
    %1724 = vmatpush2.msra.mxu0 0.0
    %1725 = vmatprep.subr.mxu0 0.0
    %1726 = vmatpush2.msra.mxu0 0.0
    %1727 = vmatprep.subr.mxu0 0.0
    %1728 = vmatpush2.msra.mxu0 0.0
    %1729 = vmatprep.subr.mxu0 0.0
    %1730 = vmatpush2.msra.mxu0 0.0
    %1731 = vmatprep.subr.mxu0 0.0
    %1732 = vmatpush2.msra.mxu0 0.0
    %1733 = vmatprep.subr.mxu0 0.0
    %1734 = vmatpush2.msra.mxu0 0.0
    %1735 = vmatprep.subr.mxu0 0.0
    %1736 = vmatpush2.msra.mxu0 0.0
    %1737 = vmatprep.mubr.f32.mxu0 0.0
    %1738 = vmatmul.mubr.f32.gmra.mxu0 %v1668
    %v1739 = vpop.f32.mrf.mxu0
    %v1740 = vadd.f32 %v1659, %v1739
    %v1741 = vpop.f32.mrf.mxu0
    %1742 = vmatprep.mubr.f32.mxu0 0.0
    %1743 = vmatmul.mubr.f32.gmra.mxu0 %v1671
    %v1744 = vpop.f32.mrf.mxu0
    %v1745 = vadd.f32 %v1664, %v1744
    %v1746 = vpop.f32.mrf.mxu0
    %1747 = vdwg.mxu0
    %v1749 = vlaneseq
    %v1750 = vshrl.u32 %v1749, 7
    %v1751 = vsub.s32 0, %v1750
    %v1752 = vrot.slane %v316, %v1751
    %v1754 = vadd.f32 %v1740, %v1752
    %v1755 = vadd.f32 %v1745, %v1752
    %v1756 = vsel %vm957, %v1754, 0.0
    %v1757 = vsel %vm957, %v1755, 0.0
    %v1758 = vadd.f32 %v1756, %v1757
    %v1759 = vrot.slane %v1758, 4
    %v1760 = vadd.f32 %v1758, %v1759
    %v1761 = vrot.slane %v1760, 2
    %v1762 = vadd.f32 %v1760, %v1761
    %v1763 = vrot.slane %v1762, 1
    %v1764 = vadd.f32 %v1762, %v1763
    %v1765 = vmul.f32 %v1764, %v967
    %v1766 = vsub.f32 %v1754, %v1765
    %v1767 = vsub.f32 %v1755, %v1765
    %v1768 = vmul.f32 %v1766, %v1766
    %v1769 = vmul.f32 %v1767, %v1767
    %v1770 = vsel %vm957, %v1768, 0.0
    %v1771 = vsel %vm957, %v1769, 0.0
    %v1772 = vadd.f32 %v1770, %v1771
    %v1773 = vrot.slane %v1772, 4
    %v1774 = vadd.f32 %v1772, %v1773
    %v1775 = vrot.slane %v1774, 2
    %v1776 = vadd.f32 %v1774, %v1775
    %v1777 = vrot.slane %v1776, 1
    %v1778 = vadd.f32 %v1776, %v1777
    %v1779 = vmul.f32 %v1778, %v967
    %v1780 = vadd.f32 %v1779, 1.0
    %v1781 = vrsqrt.pop %v1780
    %v1782 = vmul.f32 %v1766, %v1781
    %v1783 = vmul.f32 %v1767, %v1781
    %v1785 = vlaneseq
    %v1786 = vshrl.u32 %v1785, 7
    %v1787 = vsub.s32 0, %v1786
    %v1788 = vrot.slane %v320, %v1787
    %v1790 = vmul.f32 %v1788, %v1782
    %v1791 = vmul.f32 %v1788, %v1783
    %v1793 = vlaneseq
    %v1794 = vshrl.u32 %v1793, 7
    %v1795 = vsub.s32 0, %v1794
    %v1796 = vrot.slane %v318, %v1795
    %v1798 = vadd.f32 %v1790, %v1796
    %v1799 = vadd.f32 %v1791, %v1796
    %vm1800 = vcmp.ge.f32.partialorder %v1798, 0.0
    %vm1801 = vcmp.ge.f32.partialorder %v1799, 0.0
    %v1802 = vmul.f32 %v1798, 0.01
    %v1803 = vmul.f32 %v1799, 0.01
    %v1804 = vsel %vm1800, %v1798, %v1802
    %v1805 = vsel %vm1801, %v1799, %v1803
    %v1807 = vsel %vm957, %v1170, 0
    %v1810 = vsel %vm957, %v1171, 0
    %v1813 = vsel %vm957, %v1172, 0
    %1815 = vmatprep.subr.mxu0 0.0
    %1816 = vmatpush1.msra.mxu0 0.0
    %1817 = vmatprep.subr.mxu0 0.0
    %1818 = vmatpush1.msra.mxu0 0.0
    %1819 = vmatprep.subr.mxu0 0.0
    %1820 = vmatpush1.msra.mxu0 0.0
    %1821 = vmatprep.subr.mxu0 0.0
    %1822 = vmatpush1.msra.mxu0 0.0
    %1823 = vmatprep.subr.mxu0 0.0
    %1824 = vmatpush1.msra.mxu0 0.0
    %1825 = vmatprep.subr.mxu0 0.0
    %1826 = vmatpush1.msra.mxu0 0.0
    %1827 = vmatprep.subr.mxu0 0.0
    %1828 = vmatpush1.msra.mxu0 0.0
    %1829 = vmatprep.subr.mxu0 0.0
    %1830 = vmatpush1.msra.mxu0 0.0
    %1831 = vmatprep.subr.mxu0 0.0
    %1832 = vmatpush1.msra.mxu0 0.0
    %1833 = vmatprep.subr.mxu0 0.0
    %1834 = vmatpush1.msra.mxu0 0.0
    %1835 = vmatprep.subr.mxu0 0.0
    %1836 = vmatpush1.msra.mxu0 0.0
    %1837 = vmatprep.subr.mxu0 0.0
    %1838 = vmatpush1.msra.mxu0 0.0
    %1839 = vmatprep.subr.mxu0 0.0
    %1840 = vmatpush1.msra.mxu0 %v329
    %1841 = vmatprep.subr.mxu0 0.0
    %1842 = vmatpush1.msra.mxu0 %v328
    %1843 = vmatprep.subr.mxu0 0.0
    %1844 = vmatpush1.msra.mxu0 %v327
    %1845 = vmatprep.subr.mxu0 0.0
    %1846 = vmatpush1.msra.mxu0 %v326
    %1847 = vmatprep.subr.mxu0 0.0
    %1848 = vmatpush2.msra.mxu0 0.0
    %1849 = vmatprep.subr.mxu0 0.0
    %1850 = vmatpush2.msra.mxu0 0.0
    %1851 = vmatprep.subr.mxu0 0.0
    %1852 = vmatpush2.msra.mxu0 0.0
    %1853 = vmatprep.subr.mxu0 0.0
    %1854 = vmatpush2.msra.mxu0 0.0
    %1855 = vmatprep.subr.mxu0 0.0
    %1856 = vmatpush2.msra.mxu0 0.0
    %1857 = vmatprep.subr.mxu0 0.0
    %1858 = vmatpush2.msra.mxu0 0.0
    %1859 = vmatprep.subr.mxu0 0.0
    %1860 = vmatpush2.msra.mxu0 0.0
    %1861 = vmatprep.subr.mxu0 0.0
    %1862 = vmatpush2.msra.mxu0 0.0
    %1863 = vmatprep.subr.mxu0 0.0
    %1864 = vmatpush2.msra.mxu0 0.0
    %1865 = vmatprep.subr.mxu0 0.0
    %1866 = vmatpush2.msra.mxu0 0.0
    %1867 = vmatprep.subr.mxu0 0.0
    %1868 = vmatpush2.msra.mxu0 0.0
    %1869 = vmatprep.subr.mxu0 0.0
    %1870 = vmatpush2.msra.mxu0 0.0
    %1871 = vmatprep.subr.mxu0 0.0
    %1872 = vmatpush2.msra.mxu0 0.0
    %1873 = vmatprep.subr.mxu0 0.0
    %1874 = vmatpush2.msra.mxu0 0.0
    %1875 = vmatprep.subr.mxu0 0.0
    %1876 = vmatpush2.msra.mxu0 0.0
    %1877 = vmatprep.subr.mxu0 0.0
    %1878 = vmatpush2.msra.mxu0 0.0
    %1879 = vmatprep.mubr.f32.mxu0 0.0
    %1880 = vmatmul.mubr.f32.gmra.mxu0 %v1807
    %v1881 = vpop.f32.mrf.mxu0
    %v1882 = vadd.f32 0.0, %v1881
    %v1883 = vpop.f32.mrf.mxu0
    %1884 = vmatprep.mubr.f32.mxu0 0.0
    %1885 = vmatmul.mubr.f32.gmra.mxu0 %v1810
    %v1886 = vpop.f32.mrf.mxu0
    %v1887 = vadd.f32 0.0, %v1886
    %v1888 = vpop.f32.mrf.mxu0
    %1889 = vmatprep.mubr.f32.mxu0 0.0
    %1890 = vmatmul.mubr.f32.gmra.mxu0 %v1813
    %v1891 = vpop.f32.mrf.mxu0
    %v1892 = vadd.f32 0.0, %v1891
    %v1893 = vpop.f32.mrf.mxu0
    %1894 = vdwg.mxu0
    %v1895 = vadd.f32 %v1573, %v1882
    %v1896 = vadd.f32 %v1578, %v1887
    %v1897 = vadd.f32 %v1583, %v1892
    %v1899 = vlaneseq
    %v1900 = vshrl.u32 %v1899, 7
    %v1901 = vsub.s32 0, %v1900
    %v1902 = vrot.slane %v317, %v1901
    %v1904 = vadd.f32 %v1895, %v1902
    %v1905 = vadd.f32 %v1896, %v1902
    %v1906 = vadd.f32 %v1897, %v1902
    %v1907 = vsel %vm957, %v1904, 0.0
    %v1908 = vsel %vm957, %v1905, 0.0
    %v1909 = vadd.f32 %v1907, %v1908
    %v1910 = vsel %vm957, %v1906, 0.0
    %v1911 = vadd.f32 %v1909, %v1910
    %v1912 = vrot.slane %v1911, 4
    %v1913 = vadd.f32 %v1911, %v1912
    %v1914 = vrot.slane %v1913, 2
    %v1915 = vadd.f32 %v1913, %v1914
    %v1916 = vrot.slane %v1915, 1
    %v1917 = vadd.f32 %v1915, %v1916
    %v1918 = vmul.f32 %v1917, %v1121
    %v1919 = vsub.f32 %v1904, %v1918
    %v1920 = vsub.f32 %v1905, %v1918
    %v1921 = vsub.f32 %v1906, %v1918
    %v1922 = vmul.f32 %v1919, %v1919
    %v1923 = vmul.f32 %v1920, %v1920
    %v1924 = vmul.f32 %v1921, %v1921
    %v1925 = vsel %vm957, %v1922, 0.0
    %v1926 = vsel %vm957, %v1923, 0.0
    %v1927 = vadd.f32 %v1925, %v1926
    %v1928 = vsel %vm957, %v1924, 0.0
    %v1929 = vadd.f32 %v1927, %v1928
    %v1930 = vrot.slane %v1929, 4
    %v1931 = vadd.f32 %v1929, %v1930
    %v1932 = vrot.slane %v1931, 2
    %v1933 = vadd.f32 %v1931, %v1932
    %v1934 = vrot.slane %v1933, 1
    %v1935 = vadd.f32 %v1933, %v1934
    %v1936 = vmul.f32 %v1935, %v1121
    %v1937 = vadd.f32 %v1936, 1.0
    %v1938 = vrsqrt.pop %v1937
    %v1939 = vmul.f32 %v1919, %v1938
    %v1940 = vmul.f32 %v1920, %v1938
    %v1941 = vmul.f32 %v1921, %v1938
    %v1943 = vlaneseq
    %v1944 = vshrl.u32 %v1943, 7
    %v1945 = vsub.s32 0, %v1944
    %v1946 = vrot.slane %v321, %v1945
    %v1948 = vmul.f32 %v1946, %v1939
    %v1949 = vmul.f32 %v1946, %v1940
    %v1950 = vmul.f32 %v1946, %v1941
    %v1952 = vlaneseq
    %v1953 = vshrl.u32 %v1952, 7
    %v1954 = vsub.s32 0, %v1953
    %v1955 = vrot.slane %v319, %v1954
    %v1957 = vadd.f32 %v1948, %v1955
    %v1958 = vadd.f32 %v1949, %v1955
    %v1959 = vadd.f32 %v1950, %v1955
    %vm1960 = vcmp.ge.f32.partialorder %v1957, 0.0
    %vm1961 = vcmp.ge.f32.partialorder %v1958, 0.0
    %vm1962 = vcmp.ge.f32.partialorder %v1959, 0.0
    %v1963 = vmul.f32 %v1957, 0.01
    %v1964 = vmul.f32 %v1958, 0.01
    %v1965 = vmul.f32 %v1959, 0.01
    %v1966 = vsel %vm1960, %v1957, %v1963
    %v1967 = vsel %vm1961, %v1958, %v1964
    %v1968 = vsel %vm1962, %v1959, %v1965
    %v1970 = vlaneseq
    %v1971 = vshrl.u32 %v1970, 7
    %v1972 = vsub.s32 0, %v1971
    %v1973 = vrot.slane %v292, %v1972
    %v1976 = vsel %vm957, %v1804, 0
    %v1979 = vsel %vm957, %v1805, 0
    %1981 = vmatprep.subr.mxu0 0.0
    %1982 = vmatpush1.msra.mxu0 0.0
    %1983 = vmatprep.subr.mxu0 0.0
    %1984 = vmatpush1.msra.mxu0 0.0
    %1985 = vmatprep.subr.mxu0 0.0
    %1986 = vmatpush1.msra.mxu0 0.0
    %1987 = vmatprep.subr.mxu0 0.0
    %1988 = vmatpush1.msra.mxu0 0.0
    %1989 = vmatprep.subr.mxu0 0.0
    %1990 = vmatpush1.msra.mxu0 0.0
    %1991 = vmatprep.subr.mxu0 0.0
    %1992 = vmatpush1.msra.mxu0 0.0
    %1993 = vmatprep.subr.mxu0 0.0
    %1994 = vmatpush1.msra.mxu0 0.0
    %1995 = vmatprep.subr.mxu0 0.0
    %1996 = vmatpush1.msra.mxu0 0.0
    %1997 = vmatprep.subr.mxu0 0.0
    %1998 = vmatpush1.msra.mxu0 0.0
    %1999 = vmatprep.subr.mxu0 0.0
    %2000 = vmatpush1.msra.mxu0 0.0
    %2001 = vmatprep.subr.mxu0 0.0
    %2002 = vmatpush1.msra.mxu0 0.0
    %2003 = vmatprep.subr.mxu0 0.0
    %2004 = vmatpush1.msra.mxu0 0.0
    %2005 = vmatprep.subr.mxu0 0.0
    %2006 = vmatpush1.msra.mxu0 %v296
    %2007 = vmatprep.subr.mxu0 0.0
    %2008 = vmatpush1.msra.mxu0 %v295
    %2009 = vmatprep.subr.mxu0 0.0
    %2010 = vmatpush1.msra.mxu0 %v294
    %2011 = vmatprep.subr.mxu0 0.0
    %2012 = vmatpush1.msra.mxu0 %v293
    %2013 = vmatprep.subr.mxu0 0.0
    %2014 = vmatpush2.msra.mxu0 0.0
    %2015 = vmatprep.subr.mxu0 0.0
    %2016 = vmatpush2.msra.mxu0 0.0
    %2017 = vmatprep.subr.mxu0 0.0
    %2018 = vmatpush2.msra.mxu0 0.0
    %2019 = vmatprep.subr.mxu0 0.0
    %2020 = vmatpush2.msra.mxu0 0.0
    %2021 = vmatprep.subr.mxu0 0.0
    %2022 = vmatpush2.msra.mxu0 0.0
    %2023 = vmatprep.subr.mxu0 0.0
    %2024 = vmatpush2.msra.mxu0 0.0
    %2025 = vmatprep.subr.mxu0 0.0
    %2026 = vmatpush2.msra.mxu0 0.0
    %2027 = vmatprep.subr.mxu0 0.0
    %2028 = vmatpush2.msra.mxu0 0.0
    %2029 = vmatprep.subr.mxu0 0.0
    %2030 = vmatpush2.msra.mxu0 0.0
    %2031 = vmatprep.subr.mxu0 0.0
    %2032 = vmatpush2.msra.mxu0 0.0
    %2033 = vmatprep.subr.mxu0 0.0
    %2034 = vmatpush2.msra.mxu0 0.0
    %2035 = vmatprep.subr.mxu0 0.0
    %2036 = vmatpush2.msra.mxu0 0.0
    %2037 = vmatprep.subr.mxu0 0.0
    %2038 = vmatpush2.msra.mxu0 0.0
    %2039 = vmatprep.subr.mxu0 0.0
    %2040 = vmatpush2.msra.mxu0 0.0
    %2041 = vmatprep.subr.mxu0 0.0
    %2042 = vmatpush2.msra.mxu0 0.0
    %2043 = vmatprep.subr.mxu0 0.0
    %2044 = vmatpush2.msra.mxu0 0.0
    %2045 = vmatprep.mubr.f32.mxu0 0.0
    %2046 = vmatmul.mubr.f32.gmra.mxu0 %v1976
    %v2047 = vpop.f32.mrf.mxu0
    %v2048 = vadd.f32 %v1973, %v2047
    %v2049 = vpop.f32.mrf.mxu0
    %2050 = vmatprep.mubr.f32.mxu0 0.0
    %2051 = vmatmul.mubr.f32.gmra.mxu0 %v1979
    %v2052 = vpop.f32.mrf.mxu0
    %v2053 = vadd.f32 %v1973, %v2052
    %v2054 = vpop.f32.mrf.mxu0
    %2055 = vdwg.mxu0
    %vm2056 = vcmask 7168
    %2057 = vst.msk [vmem:[%s63] sm:$0xff] %vm2056, %v2048
    %2058 = vst.msk [vmem:[%s63 + $0x8] sm:$0xff] %vm2056, %v2053
    %v2060 = vlaneseq
    %v2061 = vshrl.u32 %v2060, 7
    %v2062 = vsub.s32 0, %v2061
    %v2063 = vrot.slane %v297, %v2062
    %v2066 = vsel %vm957, %v1966, 0
    %v2069 = vsel %vm957, %v1967, 0
    %v2072 = vsel %vm957, %v1968, 0
    %2074 = vmatprep.subr.mxu0 0.0
    %2075 = vmatpush1.msra.mxu0 0.0
    %2076 = vmatprep.subr.mxu0 0.0
    %2077 = vmatpush1.msra.mxu0 0.0
    %2078 = vmatprep.subr.mxu0 0.0
    %2079 = vmatpush1.msra.mxu0 0.0
    %2080 = vmatprep.subr.mxu0 0.0
    %2081 = vmatpush1.msra.mxu0 0.0
    %2082 = vmatprep.subr.mxu0 0.0
    %2083 = vmatpush1.msra.mxu0 0.0
    %2084 = vmatprep.subr.mxu0 0.0
    %2085 = vmatpush1.msra.mxu0 0.0
    %2086 = vmatprep.subr.mxu0 0.0
    %2087 = vmatpush1.msra.mxu0 0.0
    %2088 = vmatprep.subr.mxu0 0.0
    %2089 = vmatpush1.msra.mxu0 0.0
    %2090 = vmatprep.subr.mxu0 0.0
    %2091 = vmatpush1.msra.mxu0 0.0
    %2092 = vmatprep.subr.mxu0 0.0
    %2093 = vmatpush1.msra.mxu0 0.0
    %2094 = vmatprep.subr.mxu0 0.0
    %2095 = vmatpush1.msra.mxu0 0.0
    %2096 = vmatprep.subr.mxu0 0.0
    %2097 = vmatpush1.msra.mxu0 0.0
    %2098 = vmatprep.subr.mxu0 0.0
    %2099 = vmatpush1.msra.mxu0 %v301
    %2100 = vmatprep.subr.mxu0 0.0
    %2101 = vmatpush1.msra.mxu0 %v300
    %2102 = vmatprep.subr.mxu0 0.0
    %2103 = vmatpush1.msra.mxu0 %v299
    %2104 = vmatprep.subr.mxu0 0.0
    %2105 = vmatpush1.msra.mxu0 %v298
    %2106 = vmatprep.subr.mxu0 0.0
    %2107 = vmatpush2.msra.mxu0 0.0
    %2108 = vmatprep.subr.mxu0 0.0
    %2109 = vmatpush2.msra.mxu0 0.0
    %2110 = vmatprep.subr.mxu0 0.0
    %2111 = vmatpush2.msra.mxu0 0.0
    %2112 = vmatprep.subr.mxu0 0.0
    %2113 = vmatpush2.msra.mxu0 0.0
    %2114 = vmatprep.subr.mxu0 0.0
    %2115 = vmatpush2.msra.mxu0 0.0
    %2116 = vmatprep.subr.mxu0 0.0
    %2117 = vmatpush2.msra.mxu0 0.0
    %2118 = vmatprep.subr.mxu0 0.0
    %2119 = vmatpush2.msra.mxu0 0.0
    %2120 = vmatprep.subr.mxu0 0.0
    %2121 = vmatpush2.msra.mxu0 0.0
    %2122 = vmatprep.subr.mxu0 0.0
    %2123 = vmatpush2.msra.mxu0 0.0
    %2124 = vmatprep.subr.mxu0 0.0
    %2125 = vmatpush2.msra.mxu0 0.0
    %2126 = vmatprep.subr.mxu0 0.0
    %2127 = vmatpush2.msra.mxu0 0.0
    %2128 = vmatprep.subr.mxu0 0.0
    %2129 = vmatpush2.msra.mxu0 0.0
    %2130 = vmatprep.subr.mxu0 0.0
    %2131 = vmatpush2.msra.mxu0 0.0
    %2132 = vmatprep.subr.mxu0 0.0
    %2133 = vmatpush2.msra.mxu0 0.0
    %2134 = vmatprep.subr.mxu0 0.0
    %2135 = vmatpush2.msra.mxu0 0.0
    %2136 = vmatprep.subr.mxu0 0.0
    %2137 = vmatpush2.msra.mxu0 0.0
    %2138 = vmatprep.mubr.f32.mxu0 0.0
    %2139 = vmatmul.mubr.f32.gmra.mxu0 %v2066
    %v2140 = vpop.f32.mrf.mxu0
    %v2141 = vadd.f32 %v2063, %v2140
    %v2142 = vpop.f32.mrf.mxu0
    %2143 = vmatprep.mubr.f32.mxu0 0.0
    %2144 = vmatmul.mubr.f32.gmra.mxu0 %v2069
    %v2145 = vpop.f32.mrf.mxu0
    %v2146 = vadd.f32 %v2063, %v2145
    %v2147 = vpop.f32.mrf.mxu0
    %2148 = vmatprep.mubr.f32.mxu0 0.0
    %2149 = vmatmul.mubr.f32.gmra.mxu0 %v2072
    %v2150 = vpop.f32.mrf.mxu0
    %v2151 = vadd.f32 %v2063, %v2150
    %v2152 = vpop.f32.mrf.mxu0
    %2153 = vdwg.mxu0
    %2154 = vst.msk [vmem:[%s65] sm:$0xff] %vm2056, %v2141
    %2155 = vst.msk [vmem:[%s65 + $0x8] sm:$0xff] %vm2056, %v2146
    %2156 = vst.msk [vmem:[%s65 + $0x10] sm:$0xff] %vm2056, %v2151
    // Predicated region
    $region174: #{tpu_custom_call.1} parent=1 // pred_check
      _
    $region175: #{tpu_custom_call.1} parent=1 // pred_check_branch
      %2158 = sbr.rel (0) target = $region177
    $region176: #{tpu_custom_call.1} parent=1 // pred_region
      _
    $region177: #{tpu_custom_call.1} parent=1 // pred_fallthru
      _
    // Predicated region
    $region178: #{tpu_custom_call.1} parent=1 // pred_check
      _
    $region179: #{tpu_custom_call.1} parent=1 // pred_check_branch
      %2160 = sbr.rel (0) target = $region181
    $region180: #{tpu_custom_call.1} parent=1 // pred_region
      _
    $region181: #{tpu_custom_call.1} parent=1 // pred_fallthru
      _
    // Predicated region
    $region182: #{tpu_custom_call.1} parent=1 // pred_check
      _
    $region183: #{tpu_custom_call.1} parent=1 // pred_check_branch
      %2162 = sbr.rel (0) target = $region185
    $region184: #{tpu_custom_call.1} parent=1 // pred_region
      _
    $region185: #{tpu_custom_call.1} parent=1 // pred_fallthru
      _
    // Predicated region
    $region186: #{tpu_custom_call.1} parent=1 // pred_check
      _
    $region187: #{tpu_custom_call.1} parent=1 // pred_check_branch
      %2164 = sbr.rel (0) target = $region189
    $region188: #{tpu_custom_call.1} parent=1 // pred_region
      _
    $region189: #{tpu_custom_call.1} parent=1 // pred_fallthru
      _
    %2165 = vsyncpa [#allocation5], 1
    %2166 = vsyncpa [#allocation7], 1
    %2167 = vsyncpa [#allocation10], 1
    %2168 = vsyncpa [#allocation13], 1
    %2169 = vsyncpa [#allocation16], 1
    %2170 = vsyncpa [#allocation19], 1
    %2171 = vsyncpa [#allocation22], 1

</llo_original>
